<compile_context>
chip_gen: v6e
topology: v6e:2x2x1
jax: 0.10.0
libtpu: 0.0.40
codegen_flags: <defaults>
</compile_context>

<pallas_src>
import functools

import jax
import jax.numpy as jnp
from jax.experimental import pallas as pl
from jax.experimental.pallas import tpu as pltpu


def _round_up(x, m):
    return ((x + m - 1) // m) * m


def _attn_decoder_kernel(L, V,                 # static actual sizes (closure)
                         tok_ref,              # SMEM (1,) int32 (used by index_map only)
                         emb_ref,              # VMEM (1, 1, Hp) f32 : gathered embedding row
                         h_ref,                # VMEM (1, Hp) f32 : previous hidden (zero padded)
                         enc_ref,              # VMEM (Lp, Hp) f32 : encoder outputs (zero padded)
                         w_attn_ref,           # VMEM (2Hp, Lp) bf16
                         b_attn_ref,           # VMEM (1, Lp) f32
                         w_comb_ref,           # VMEM (2Hp, Hp) bf16
                         b_comb_ref,           # VMEM (1, Hp) f32
                         w_gru_ref,            # VMEM (2Hp, 4Hp) bf16 : fused [r | z | n_x | n_h]
                         b_gru_ref,            # VMEM (1, 4Hp) f32 : [b_r, b_z, b_ih_n, b_hh_n]
                         w_out_ref,            # VMEM (Hp, Vp) bf16
                         b_out_ref,            # VMEM (1, Vp) f32
                         logp_ref,             # out VMEM (1, Vp) f32
                         hnew_ref,             # out VMEM (1, Hp) f32
                         attw_ref):            # out VMEM (1, Lp) f32
    del tok_ref  # gather already done by the pipeline via the index_map
    Hp = h_ref.shape[1]
    Lp = enc_ref.shape[0]
    Vp = b_out_ref.shape[1]

    # ---- embedded token row (already DMA'd into VMEM by the pipeline) ----
    x_f32 = emb_ref[0]                                 # (1, Hp) f32
    # TODO(synk): dropout(p=0.1) treated as eval-mode identity.
    x_bf = x_f32.astype(jnp.bfloat16)

    h_f32 = h_ref[...]                                 # (1, Hp) f32
    h_bf = h_f32.astype(jnp.bfloat16)

    # ---- attention weights: softmax(attn(cat(embedded, hidden))) over max_length ----
    eh = jnp.concatenate([x_bf, h_bf], axis=1)         # (1, 2Hp) bf16
    a_logits = jnp.dot(eh, w_attn_ref[...],
                       preferred_element_type=jnp.float32) + b_attn_ref[...]
    lane_l = jax.lax.broadcasted_iota(jnp.int32, (1, Lp), 1)
    a_logits = jnp.where(lane_l < L, a_logits, -jnp.inf)   # mask padded positions
    a_max = jnp.max(a_logits, axis=1, keepdims=True)
    a_exp = jnp.exp(a_logits - a_max)
    attn_w = a_exp * pl.reciprocal(jnp.sum(a_exp, axis=1, keepdims=True),
                                   approx=True)        # (1, Lp) f32, padded lanes exactly 0

    # ---- attn_applied = attn_weights @ encoder_outputs ----
    attn_applied = jnp.dot(attn_w, enc_ref[...],
                           preferred_element_type=jnp.float32)   # (1, Hp) f32

    # ---- attn_combine(cat(embedded, attn_applied)) + relu ----
    comb_in = jnp.concatenate([x_bf, attn_applied.astype(jnp.bfloat16)], axis=1)
    gru_x = jnp.maximum(
        jnp.dot(comb_in, w_comb_ref[...],
                preferred_element_type=jnp.float32) + b_comb_ref[...], 0.0)      # (1, Hp)

    # ---- fused single-matmul GRU cell (PyTorch gate order r, z, n) ----
    xh = jnp.concatenate([gru_x.astype(jnp.bfloat16), h_bf], axis=1)             # (1, 2Hp)
    g = jnp.dot(xh, w_gru_ref[...],
                preferred_element_type=jnp.float32) + b_gru_ref[...]             # (1, 4Hp)
    r = jax.nn.sigmoid(g[:, 0:Hp])
    z = jax.nn.sigmoid(g[:, Hp:2 * Hp])
    n = jnp.tanh(g[:, 2 * Hp:3 * Hp] + r * g[:, 3 * Hp:4 * Hp])
    h_new = (1.0 - z) * n + z * h_f32                                            # (1, Hp)

    # ---- output projection + masked log-softmax ----
    logits = jnp.dot(h_new.astype(jnp.bfloat16), w_out_ref[...],
                     preferred_element_type=jnp.float32) + b_out_ref[...]        # (1, Vp)
    lane_v = jax.lax.broadcasted_iota(jnp.int32, (1, Vp), 1)
    logits = jnp.where(lane_v < V, logits, -jnp.inf)
    m = jnp.max(logits, axis=1, keepdims=True)
    shifted = logits - m
    lse = jnp.log(jnp.sum(jnp.exp(shifted), axis=1, keepdims=True))

    logp_ref[...] = shifted - lse
    hnew_ref[...] = h_new
    attw_ref[...] = attn_w


def pack_params(params, max_length):
    """Pad lane dims to 128, fuse GRU weights/biases, cast big weights to bf16."""
    emb = params["embedding"]
    V, H = emb.shape
    L = max_length
    Hp, Vp, Lp = _round_up(H, 128), _round_up(V, 128), _round_up(L, 128)

    w_attn, b_attn = params["w_attn"], params["b_attn"]      # (L, 2H), (L,)
    w_comb, b_comb = params["w_comb"], params["b_comb"]      # (H, 2H), (H,)
    w_ih, w_hh = params["w_ih"], params["w_hh"]              # (3H, H)
    b_ih, b_hh = params["b_ih"], params["b_hh"]              # (3H,)
    w_out, b_out = params["w_out"], params["b_out"]          # (V, H), (V,)

    # embedding table stays f32 in HBM; only one (1,1,Hp) row block is gathered
    # per step by the data-dependent index_map (scalar prefetch).
    emb_p = jnp.zeros((V, 1, Hp), jnp.float32).at[:, 0, :H].set(emb)

    w_attn_p = (jnp.zeros((2 * Hp, Lp), jnp.float32)
                .at[0:H, 0:L].set(w_attn[:, 0:H].T)
                .at[Hp:Hp + H, 0:L].set(w_attn[:, H:2 * H].T)
                .astype(jnp.bfloat16))
    b_attn_p = jnp.zeros((1, Lp), jnp.float32).at[0, 0:L].set(b_attn)

    w_comb_p = (jnp.zeros((2 * Hp, Hp), jnp.float32)
                .at[0:H, 0:H].set(w_comb[:, 0:H].T)
                .at[Hp:Hp + H, 0:H].set(w_comb[:, H:2 * H].T)
                .astype(jnp.bfloat16))
    b_comb_p = jnp.zeros((1, Hp), jnp.float32).at[0, 0:H].set(b_comb)

    # fused GRU weight: rows = [x-part ; h-part], cols = [r | z | n_x | n_h]
    w_gru_p = (jnp.zeros((2 * Hp, 4 * Hp), jnp.float32)
               .at[0:H, 0:H].set(w_ih[0:H].T)
               .at[Hp:Hp + H, 0:H].set(w_hh[0:H].T)
               .at[0:H, Hp:Hp + H].set(w_ih[H:2 * H].T)
               .at[Hp:Hp + H, Hp:Hp + H].set(w_hh[H:2 * H].T)
               .at[0:H, 2 * Hp:2 * Hp + H].set(w_ih[2 * H:3 * H].T)
               .at[Hp:Hp + H, 3 * Hp:3 * Hp + H].set(w_hh[2 * H:3 * H].T)
               .astype(jnp.bfloat16))
    b_gru_p = (jnp.zeros((1, 4 * Hp), jnp.float32)
               .at[0, 0:H].set(b_ih[0:H] + b_hh[0:H])                  # combined r bias
               .at[0, Hp:Hp + H].set(b_ih[H:2 * H] + b_hh[H:2 * H])    # combined z bias
               .at[0, 2 * Hp:2 * Hp + H].set(b_ih[2 * H:3 * H])        # b_ih_n
               .at[0, 3 * Hp:3 * Hp + H].set(b_hh[2 * H:3 * H]))       # b_hh_n

    w_out_p = (jnp.zeros((Hp, Vp), jnp.float32)
               .at[0:H, 0:V].set(w_out.T).astype(jnp.bfloat16))
    b_out_p = jnp.zeros((1, Vp), jnp.float32).at[0, 0:V].set(b_out)

    return dict(H=H, V=V, L=L, Hp=Hp, Vp=Vp, Lp=Lp,
                emb=emb_p, w_attn=w_attn_p, b_attn=b_attn_p,
                w_comb=w_comb_p, b_comb=b_comb_p,
                w_gru=w_gru_p, b_gru=b_gru_p,
                w_out=w_out_p, b_out=b_out_p)


def make_attn_decoder_step(packed):
    """Returns a jitted step(token, hidden, encoder_outputs) ->
       (log_probs (1,V), hidden (1,1,H), attn_weights (1,L))."""
    H, V, L = packed["H"], packed["V"], packed["L"]
    Hp, Vp, Lp = packed["Hp"], packed["Vp"], packed["Lp"]

    emb = packed["emb"]
    w_attn, b_attn = packed["w_attn"], packed["b_attn"]
    w_comb, b_comb = packed["w_comb"], packed["b_comb"]
    w_gru, b_gru = packed["w_gru"], packed["b_gru"]
    w_out, b_out = packed["w_out"], packed["b_out"]

    kernel = functools.partial(_attn_decoder_kernel, L, V)

    def zero2(i, tok):
        return (0, 0)

    grid_spec = pltpu.PrefetchScalarGridSpec(
        num_scalar_prefetch=1,              # token id lands in SMEM, drives the gather
        grid=(1,),
        in_specs=[
            # data-dependent embedding-row gather: block (1,1,Hp) at row tok[0]
            pl.BlockSpec((1, 1, Hp), lambda i, tok: (tok[0], 0, 0)),
            pl.BlockSpec((1, Hp), zero2),          # hidden
            pl.BlockSpec((Lp, Hp), zero2),         # encoder outputs
            pl.BlockSpec((2 * Hp, Lp), zero2),     # w_attn
            pl.BlockSpec((1, Lp), zero2),          # b_attn
            pl.BlockSpec((2 * Hp, Hp), zero2),     # w_comb
            pl.BlockSpec((1, Hp), zero2),          # b_comb
            pl.BlockSpec((2 * Hp, 4 * Hp), zero2),  # w_gru (fused)
            pl.BlockSpec((1, 4 * Hp), zero2),      # b_gru (fused)
            pl.BlockSpec((Hp, Vp), zero2),         # w_out
            pl.BlockSpec((1, Vp), zero2),          # b_out
        ],
        out_specs=[
            pl.BlockSpec((1, Vp), zero2),
            pl.BlockSpec((1, Hp), zero2),
            pl.BlockSpec((1, Lp), zero2),
        ],
    )

    decoder = pl.pallas_call(
        kernel,
        out_shape=(jax.ShapeDtypeStruct((1, Vp), jnp.float32),
                   jax.ShapeDtypeStruct((1, Hp), jnp.float32),
                   jax.ShapeDtypeStruct((1, Lp), jnp.float32)),
        grid_spec=grid_spec,
        compiler_params=pltpu.CompilerParams(
            dimension_semantics=("arbitrary",)),
    )

    @jax.jit
    def step(token, hidden, encoder_outputs):
        h_p = jnp.zeros((1, Hp), jnp.float32).at[:, :H].set(hidden.reshape(1, H))
        enc_p = jnp.zeros((Lp, Hp), jnp.float32).at[:L, :H].set(encoder_outputs)
        logp, h_new, attn_w = decoder(
            token.astype(jnp.int32),
            emb, h_p, enc_p,
            w_attn, b_attn, w_comb, b_comb,
            w_gru, b_gru, w_out, b_out)
        return logp[:, :V], h_new[:, :H].reshape(1, 1, H), attn_w[:, :L]

    return step


def _reference_forward(token, hidden, encoder_outputs, params):
    """Pure-JAX f32 reference mirroring the PyTorch AttnDecoderRNN forward (eval mode)."""
    H = params["embedding"].shape[1]
    emb = params["embedding"][token[0]].reshape(1, H)
    h = hidden.reshape(1, H)
    attn_logits = jnp.concatenate([emb, h], axis=1) @ params["w_attn"].T + params["b_attn"]
    attn_w = jax.nn.softmax(attn_logits, axis=1)
    attn_applied = attn_w @ encoder_outputs
    comb = jnp.concatenate([emb, attn_applied], axis=1) @ params["w_comb"].T + params["b_comb"]
    x = jnp.maximum(comb, 0.0)
    gi = x @ params["w_ih"].T + params["b_ih"]
    gh = h @ params["w_hh"].T + params["b_hh"]
    r = jax.nn.sigmoid(gi[:, 0:H] + gh[:, 0:H])
    z = jax.nn.sigmoid(gi[:, H:2 * H] + gh[:, H:2 * H])
    n = jnp.tanh(gi[:, 2 * H:] + r * gh[:, 2 * H:])
    h_new = (1.0 - z) * n + z * h
    logits = h_new @ params["w_out"].T + params["b_out"]
    return jax.nn.log_softmax(logits, axis=1), h_new.reshape(1, 1, H), attn_w


def init_params(key, hidden_size, output_size, max_length):
    ks = jax.random.split(key, 11)
    s = 0.1
    H, V, L = hidden_size, output_size, max_length
    return {
        "embedding": jax.random.normal(ks[0], (V, H), jnp.float32) * s,
        "w_attn": jax.random.normal(ks[1], (L, 2 * H), jnp.float32) * s,
        "b_attn": jax.random.normal(ks[2], (L,), jnp.float32) * s,
        "w_comb": jax.random.normal(ks[3], (H, 2 * H), jnp.float32) * s,
        "b_comb": jax.random.normal(ks[4], (H,), jnp.float32) * s,
        "w_ih": jax.random.normal(ks[5], (3 * H, H), jnp.float32) * s,
        "w_hh": jax.random.normal(ks[6], (3 * H, H), jnp.float32) * s,
        "b_ih": jax.random.normal(ks[7], (3 * H,), jnp.float32) * s,
        "b_hh": jax.random.normal(ks[8], (3 * H,), jnp.float32) * s,
        "w_out": jax.random.normal(ks[9], (V, H), jnp.float32) * s,
        "b_out": jax.random.normal(ks[10], (V,), jnp.float32) * s,
    }


if __name__ == "__main__":
    hidden_size = 32
    output_size = 40          # vocabulary size
    max_length = 50

    key = jax.random.PRNGKey(0)
    kp, kt, kh, ke = jax.random.split(key, 4)
    params = init_params(kp, hidden_size, output_size, max_length)

    token = jax.random.randint(kt, (1,), 0, output_size, dtype=jnp.int32)
    hidden = jax.random.normal(kh, (1, 1, hidden_size), jnp.float32) * 0.1
    encoder_outputs = jax.random.normal(ke, (max_length, hidden_size), jnp.float32) * 0.1

    packed = pack_params(params, max_length)
    step = make_attn_decoder_step(packed)
    log_probs, h_new, attn_w = step(token, hidden, encoder_outputs)
    jax.block_until_ready((log_probs, h_new, attn_w))

    ref_lp, ref_h, ref_w = _reference_forward(token, hidden, encoder_outputs, params)
    assert log_probs.shape == (1, output_size)
    assert h_new.shape == (1, 1, hidden_size)
    assert attn_w.shape == (1, max_length)
    # bf16 weights + approx reciprocal => compare against the f32 reference with
    # a tolerance well above the expected quantization error (~1e-3).
    assert jnp.allclose(log_probs, ref_lp, atol=1e-2, rtol=1e-2)
    assert jnp.allclose(h_new, ref_h, atol=1e-2, rtol=1e-2)
    assert jnp.allclose(attn_w, ref_w, atol=1e-2, rtol=1e-2)

    print("KERNEL_OK")
</pallas_src>

<mosaic_0001>
module attributes {stable_mosaic.version = 11 : i64} {
  func.func @_attn_decoder_kernel(%arg0: i32, %arg1: memref<1xi32, #tpu.memory_space<smem>>, %arg2: memref<1x1x128xf32, #tpu.memory_space<vmem>>, %arg3: memref<1x128xf32, #tpu.memory_space<vmem>>, %arg4: memref<128x128xf32, #tpu.memory_space<vmem>>, %arg5: memref<256x128xbf16, #tpu.memory_space<vmem>>, %arg6: memref<1x128xf32, #tpu.memory_space<vmem>>, %arg7: memref<256x128xbf16, #tpu.memory_space<vmem>>, %arg8: memref<1x128xf32, #tpu.memory_space<vmem>>, %arg9: memref<256x512xbf16, #tpu.memory_space<vmem>>, %arg10: memref<1x512xf32, #tpu.memory_space<vmem>>, %arg11: memref<128x128xbf16, #tpu.memory_space<vmem>>, %arg12: memref<1x128xf32, #tpu.memory_space<vmem>>, %arg13: memref<1x128xf32, #tpu.memory_space<vmem>>, %arg14: memref<1x128xf32, #tpu.memory_space<vmem>>, %arg15: memref<1x128xf32, #tpu.memory_space<vmem>>) attributes {dimension_semantics = [#tpu.dimension_semantics<arbitrary>], iteration_bounds = array<i64: 1>, scalar_prefetch = 1 : i64, scratch_operands = 0 : i64, tpu.core_type = #tpu.core_type<tc>, window_params = [{transform_indices = @transform_0, window_bounds = array<i64: 1, 1, 128>}, {pipeline_mode = #tpu.pipeline_mode<synchronous>, transform_indices = @transform_1, window_bounds = array<i64: 1, 128>}, {pipeline_mode = #tpu.pipeline_mode<synchronous>, transform_indices = @transform_2, window_bounds = array<i64: 128, 128>}, {pipeline_mode = #tpu.pipeline_mode<synchronous>, transform_indices = @transform_3, window_bounds = array<i64: 256, 128>}, {pipeline_mode = #tpu.pipeline_mode<synchronous>, transform_indices = @transform_4, window_bounds = array<i64: 1, 128>}, {pipeline_mode = #tpu.pipeline_mode<synchronous>, transform_indices = @transform_5, window_bounds = array<i64: 256, 128>}, {pipeline_mode = #tpu.pipeline_mode<synchronous>, transform_indices = @transform_6, window_bounds = array<i64: 1, 128>}, {pipeline_mode = #tpu.pipeline_mode<synchronous>, transform_indices = @transform_7, window_bounds = array<i64: 256, 512>}, {pipeline_mode = #tpu.pipeline_mode<synchronous>, transform_indices = @transform_8, window_bounds = array<i64: 1, 512>}, {pipeline_mode = #tpu.pipeline_mode<synchronous>, transform_indices = @transform_9, window_bounds = array<i64: 128, 128>}, {pipeline_mode = #tpu.pipeline_mode<synchronous>, transform_indices = @transform_10, window_bounds = array<i64: 1, 128>}, {pipeline_mode = #tpu.pipeline_mode<synchronous>, transform_indices = @transform_11, window_bounds = array<i64: 1, 128>}, {pipeline_mode = #tpu.pipeline_mode<synchronous>, transform_indices = @transform_12, window_bounds = array<i64: 1, 128>}, {pipeline_mode = #tpu.pipeline_mode<synchronous>, transform_indices = @transform_13, window_bounds = array<i64: 1, 128>}]} {
    %c0 = arith.constant 0 : index
    %c0_0 = arith.constant 0 : index
    %c0_1 = arith.constant 0 : index
    %0 = vector.load %arg2[%c0, %c0_0, %c0_1] : memref<1x1x128xf32, #tpu.memory_space<vmem>>, vector<1x1x128xf32>
    %1 = vector.shape_cast %0 : vector<1x1x128xf32> to vector<1x128xf32>
    %2 = arith.truncf %1 : vector<1x128xf32> to vector<1x128xbf16>
    %c0_2 = arith.constant 0 : index
    %c0_3 = arith.constant 0 : index
    %3 = vector.load %arg3[%c0_2, %c0_3] : memref<1x128xf32, #tpu.memory_space<vmem>>, vector<1x128xf32>
    %4 = arith.truncf %3 : vector<1x128xf32> to vector<1x128xbf16>
    %5 = tpu.concatenate %2, %4 in 1 : vector<1x128xbf16>, vector<1x128xbf16> -> vector<1x256xbf16>
    %c0_4 = arith.constant 0 : index
    %c0_5 = arith.constant 0 : index
    %6 = vector.load %arg5[%c0_4, %c0_5] : memref<256x128xbf16, #tpu.memory_space<vmem>>, vector<256x128xbf16>
    %cst = arith.constant dense<0.000000e+00> : vector<1x128xf32>
    %7 = tpu.matmul %5, %6, %cst {dimension_numbers = #tpu.dot_dimension_numbers<[1], [0], [0], [1], [0, 0, 1, 1], [], []>} : vector<1x256xbf16>, vector<256x128xbf16>, vector<1x128xf32> -> vector<1x128xf32>
    %c0_6 = arith.constant 0 : index
    %c0_7 = arith.constant 0 : index
    %8 = vector.load %arg6[%c0_6, %c0_7] : memref<1x128xf32, #tpu.memory_space<vmem>>, vector<1x128xf32>
    %9 = arith.addf %7, %8 : vector<1x128xf32>
    %10 = tpu.iota {dimensions = array<i32: 1>} : vector<1x128xi32>
    %c50_i32 = arith.constant 50 : i32
    %11 = vector.broadcast %c50_i32 : i32 to vector<1x128xi32>
    %12 = arith.cmpi slt, %10, %11 : vector<1x128xi32>
    %cst_8 = arith.constant 0xFF800000 : f32
    %13 = vector.broadcast %cst_8 : f32 to vector<1x128xf32>
    %14 = arith.select %12, %9, %13 : vector<1x128xi1>, vector<1x128xf32>
    %cst_9 = arith.constant dense<0xFF800000> : vector<1xf32>
    %15 = vector.multi_reduction <maximumf>, %14, %cst_9 [1] : vector<1x128xf32> to vector<1xf32>
    %16 = vector.shape_cast %15 : vector<1xf32> to vector<1x1xf32>
    %17 = vector.broadcast %16 : vector<1x1xf32> to vector<1x128xf32>
    %18 = arith.subf %14, %17 : vector<1x128xf32>
    %19 = math.exp %18 : vector<1x128xf32>
    %cst_10 = arith.constant dense<0.000000e+00> : vector<1xf32>
    %20 = vector.multi_reduction <add>, %19, %cst_10 [1] : vector<1x128xf32> to vector<1xf32>
    %21 = vector.shape_cast %20 : vector<1xf32> to vector<1x1xf32>
    %22 = tpu.reciprocal %21 {approx = true} : vector<1x1xf32> -> vector<1x1xf32>
    %23 = vector.broadcast %22 : vector<1x1xf32> to vector<1x128xf32>
    %24 = arith.mulf %19, %23 : vector<1x128xf32>
    %c0_11 = arith.constant 0 : index
    %c0_12 = arith.constant 0 : index
    %25 = vector.load %arg4[%c0_11, %c0_12] : memref<128x128xf32, #tpu.memory_space<vmem>>, vector<128x128xf32>
    %cst_13 = arith.constant dense<0.000000e+00> : vector<1x128xf32>
    %26 = tpu.matmul %24, %25, %cst_13 {dimension_numbers = #tpu.dot_dimension_numbers<[1], [0], [0], [1], [0, 0, 1, 1], [], []>} : vector<1x128xf32>, vector<128x128xf32>, vector<1x128xf32> -> vector<1x128xf32>
    %27 = arith.truncf %26 : vector<1x128xf32> to vector<1x128xbf16>
    %28 = tpu.concatenate %2, %27 in 1 : vector<1x128xbf16>, vector<1x128xbf16> -> vector<1x256xbf16>
    %c0_14 = arith.constant 0 : index
    %c0_15 = arith.constant 0 : index
    %29 = vector.load %arg7[%c0_14, %c0_15] : memref<256x128xbf16, #tpu.memory_space<vmem>>, vector<256x128xbf16>
    %cst_16 = arith.constant dense<0.000000e+00> : vector<1x128xf32>
    %30 = tpu.matmul %28, %29, %cst_16 {dimension_numbers = #tpu.dot_dimension_numbers<[1], [0], [0], [1], [0, 0, 1, 1], [], []>} : vector<1x256xbf16>, vector<256x128xbf16>, vector<1x128xf32> -> vector<1x128xf32>
    %c0_17 = arith.constant 0 : index
    %c0_18 = arith.constant 0 : index
    %31 = vector.load %arg8[%c0_17, %c0_18] : memref<1x128xf32, #tpu.memory_space<vmem>>, vector<1x128xf32>
    %32 = arith.addf %30, %31 : vector<1x128xf32>
    %cst_19 = arith.constant 0.000000e+00 : f32
    %33 = vector.broadcast %cst_19 : f32 to vector<1x128xf32>
    %34 = arith.maximumf %32, %33 : vector<1x128xf32>
    %35 = arith.truncf %34 : vector<1x128xf32> to vector<1x128xbf16>
    %36 = tpu.concatenate %35, %4 in 1 : vector<1x128xbf16>, vector<1x128xbf16> -> vector<1x256xbf16>
    %c0_20 = arith.constant 0 : index
    %c0_21 = arith.constant 0 : index
    %37 = vector.load %arg9[%c0_20, %c0_21] : memref<256x512xbf16, #tpu.memory_space<vmem>>, vector<256x512xbf16>
    %cst_22 = arith.constant dense<0.000000e+00> : vector<1x512xf32>
    %38 = tpu.matmul %36, %37, %cst_22 {dimension_numbers = #tpu.dot_dimension_numbers<[1], [0], [0], [1], [0, 0, 1, 1], [], []>} : vector<1x256xbf16>, vector<256x512xbf16>, vector<1x512xf32> -> vector<1x512xf32>
    %c0_23 = arith.constant 0 : index
    %c0_24 = arith.constant 0 : index
    %39 = vector.load %arg10[%c0_23, %c0_24] : memref<1x512xf32, #tpu.memory_space<vmem>>, vector<1x512xf32>
    %40 = arith.addf %38, %39 : vector<1x512xf32>
    %41 = vector.extract_strided_slice %40 {offsets = [0, 0], sizes = [1, 128], strides = [1, 1]} : vector<1x512xf32> to vector<1x128xf32>
    %42 = arith.negf %41 : vector<1x128xf32>
    %43 = math.exp %42 : vector<1x128xf32>
    %cst_25 = arith.constant 1.000000e+00 : f32
    %44 = vector.broadcast %cst_25 : f32 to vector<1x128xf32>
    %45 = arith.addf %44, %43 : vector<1x128xf32>
    %46 = arith.divf %44, %45 : vector<1x128xf32>
    %47 = vector.extract_strided_slice %40 {offsets = [0, 128], sizes = [1, 128], strides = [1, 1]} : vector<1x512xf32> to vector<1x128xf32>
    %48 = arith.negf %47 : vector<1x128xf32>
    %49 = math.exp %48 : vector<1x128xf32>
    %cst_26 = arith.constant 1.000000e+00 : f32
    %50 = vector.broadcast %cst_26 : f32 to vector<1x128xf32>
    %51 = arith.addf %50, %49 : vector<1x128xf32>
    %52 = arith.divf %50, %51 : vector<1x128xf32>
    %53 = vector.extract_strided_slice %40 {offsets = [0, 256], sizes = [1, 128], strides = [1, 1]} : vector<1x512xf32> to vector<1x128xf32>
    %54 = vector.extract_strided_slice %40 {offsets = [0, 384], sizes = [1, 128], strides = [1, 1]} : vector<1x512xf32> to vector<1x128xf32>
    %55 = arith.mulf %46, %54 : vector<1x128xf32>
    %56 = arith.addf %53, %55 : vector<1x128xf32>
    %57 = math.tanh %56 : vector<1x128xf32>
    %cst_27 = arith.constant 1.000000e+00 : f32
    %58 = vector.broadcast %cst_27 : f32 to vector<1x128xf32>
    %59 = arith.subf %58, %52 : vector<1x128xf32>
    %60 = arith.mulf %59, %57 : vector<1x128xf32>
    %61 = arith.mulf %52, %3 : vector<1x128xf32>
    %62 = arith.addf %60, %61 : vector<1x128xf32>
    %63 = arith.truncf %62 : vector<1x128xf32> to vector<1x128xbf16>
    %c0_28 = arith.constant 0 : index
    %c0_29 = arith.constant 0 : index
    %64 = vector.load %arg11[%c0_28, %c0_29] : memref<128x128xbf16, #tpu.memory_space<vmem>>, vector<128x128xbf16>
    %cst_30 = arith.constant dense<0.000000e+00> : vector<1x128xf32>
    %65 = tpu.matmul %63, %64, %cst_30 {dimension_numbers = #tpu.dot_dimension_numbers<[1], [0], [0], [1], [0, 0, 1, 1], [], []>} : vector<1x128xbf16>, vector<128x128xbf16>, vector<1x128xf32> -> vector<1x128xf32>
    %c0_31 = arith.constant 0 : index
    %c0_32 = arith.constant 0 : index
    %66 = vector.load %arg12[%c0_31, %c0_32] : memref<1x128xf32, #tpu.memory_space<vmem>>, vector<1x128xf32>
    %67 = arith.addf %65, %66 : vector<1x128xf32>
    %68 = tpu.iota {dimensions = array<i32: 1>} : vector<1x128xi32>
    %c40_i32 = arith.constant 40 : i32
    %69 = vector.broadcast %c40_i32 : i32 to vector<1x128xi32>
    %70 = arith.cmpi slt, %68, %69 : vector<1x128xi32>
    %cst_33 = arith.constant 0xFF800000 : f32
    %71 = vector.broadcast %cst_33 : f32 to vector<1x128xf32>
    %72 = arith.select %70, %67, %71 : vector<1x128xi1>, vector<1x128xf32>
    %cst_34 = arith.constant dense<0xFF800000> : vector<1xf32>
    %73 = vector.multi_reduction <maximumf>, %72, %cst_34 [1] : vector<1x128xf32> to vector<1xf32>
    %74 = vector.shape_cast %73 : vector<1xf32> to vector<1x1xf32>
    %75 = vector.broadcast %74 : vector<1x1xf32> to vector<1x128xf32>
    %76 = arith.subf %72, %75 : vector<1x128xf32>
    %77 = math.exp %76 : vector<1x128xf32>
    %cst_35 = arith.constant dense<0.000000e+00> : vector<1xf32>
    %78 = vector.multi_reduction <add>, %77, %cst_35 [1] : vector<1x128xf32> to vector<1xf32>
    %79 = vector.shape_cast %78 : vector<1xf32> to vector<1x1xf32>
    %80 = math.log %79 : vector<1x1xf32>
    %81 = vector.broadcast %80 : vector<1x1xf32> to vector<1x128xf32>
    %82 = arith.subf %76, %81 : vector<1x128xf32>
    %c0_36 = arith.constant 0 : index
    %c0_37 = arith.constant 0 : index
    %83 = vector.load %arg13[%c0_36, %c0_37] : memref<1x128xf32, #tpu.memory_space<vmem>>, vector<1x128xf32>
    tpu.vector_store %arg13[%c0_36, %c0_37], %82 {strides = array<i32>} : memref<1x128xf32, #tpu.memory_space<vmem>>, vector<1x128xf32>,
    %c0_38 = arith.constant 0 : index
    %c0_39 = arith.constant 0 : index
    %84 = vector.load %arg14[%c0_38, %c0_39] : memref<1x128xf32, #tpu.memory_space<vmem>>, vector<1x128xf32>
    tpu.vector_store %arg14[%c0_38, %c0_39], %62 {strides = array<i32>} : memref<1x128xf32, #tpu.memory_space<vmem>>, vector<1x128xf32>,
    %c0_40 = arith.constant 0 : index
    %c0_41 = arith.constant 0 : index
    %85 = vector.load %arg15[%c0_40, %c0_41] : memref<1x128xf32, #tpu.memory_space<vmem>>, vector<1x128xf32>
    tpu.vector_store %arg15[%c0_40, %c0_41], %24 {strides = array<i32>} : memref<1x128xf32, #tpu.memory_space<vmem>>, vector<1x128xf32>,
    return
  }
  func.func @transform_0(%arg0: i32, %arg1: memref<1xi32, #tpu.memory_space<smem>>) -> (i32, i32, i32) {
    %c0 = arith.constant 0 : index
    %0 = memref.load %arg1[%c0] : memref<1xi32, #tpu.memory_space<smem>>
    %c0_i32 = arith.constant 0 : i32
    %c0_i32_0 = arith.constant 0 : i32
    %c0_i32_1 = arith.constant 0 : i32
    return %0, %c0_i32, %c0_i32_0 : i32, i32, i32
  }
  func.func @transform_1(%arg0: i32, %arg1: memref<1xi32, #tpu.memory_space<smem>>) -> (i32, i32) {
    %c0_i32 = arith.constant 0 : i32
    %c0_i32_0 = arith.constant 0 : i32
    %c0_i32_1 = arith.constant 0 : i32
    return %c0_i32, %c0_i32_0 : i32, i32
  }
  func.func @transform_2(%arg0: i32, %arg1: memref<1xi32, #tpu.memory_space<smem>>) -> (i32, i32) {
    %c0_i32 = arith.constant 0 : i32
    %c0_i32_0 = arith.constant 0 : i32
    %c0_i32_1 = arith.constant 0 : i32
    return %c0_i32, %c0_i32_0 : i32, i32
  }
  func.func @transform_3(%arg0: i32, %arg1: memref<1xi32, #tpu.memory_space<smem>>) -> (i32, i32) {
    %c0_i32 = arith.constant 0 : i32
    %c0_i32_0 = arith.constant 0 : i32
    %c0_i32_1 = arith.constant 0 : i32
    return %c0_i32, %c0_i32_0 : i32, i32
  }
  func.func @transform_4(%arg0: i32, %arg1: memref<1xi32, #tpu.memory_space<smem>>) -> (i32, i32) {
    %c0_i32 = arith.constant 0 : i32
    %c0_i32_0 = arith.constant 0 : i32
    %c0_i32_1 = arith.constant 0 : i32
    return %c0_i32, %c0_i32_0 : i32, i32
  }
  func.func @transform_5(%arg0: i32, %arg1: memref<1xi32, #tpu.memory_space<smem>>) -> (i32, i32) {
    %c0_i32 = arith.constant 0 : i32
    %c0_i32_0 = arith.constant 0 : i32
    %c0_i32_1 = arith.constant 0 : i32
    return %c0_i32, %c0_i32_0 : i32, i32
  }
  func.func @transform_6(%arg0: i32, %arg1: memref<1xi32, #tpu.memory_space<smem>>) -> (i32, i32) {
    %c0_i32 = arith.constant 0 : i32
    %c0_i32_0 = arith.constant 0 : i32
    %c0_i32_1 = arith.constant 0 : i32
    return %c0_i32, %c0_i32_0 : i32, i32
  }
  func.func @transform_7(%arg0: i32, %arg1: memref<1xi32, #tpu.memory_space<smem>>) -> (i32, i32) {
    %c0_i32 = arith.constant 0 : i32
    %c0_i32_0 = arith.constant 0 : i32
    %c0_i32_1 = arith.constant 0 : i32
    return %c0_i32, %c0_i32_0 : i32, i32
  }
  func.func @transform_8(%arg0: i32, %arg1: memref<1xi32, #tpu.memory_space<smem>>) -> (i32, i32) {
    %c0_i32 = arith.constant 0 : i32
    %c0_i32_0 = arith.constant 0 : i32
    %c0_i32_1 = arith.constant 0 : i32
    return %c0_i32, %c0_i32_0 : i32, i32
  }
  func.func @transform_9(%arg0: i32, %arg1: memref<1xi32, #tpu.memory_space<smem>>) -> (i32, i32) {
    %c0_i32 = arith.constant 0 : i32
    %c0_i32_0 = arith.constant 0 : i32
    %c0_i32_1 = arith.constant 0 : i32
    return %c0_i32, %c0_i32_0 : i32, i32
  }
  func.func @transform_10(%arg0: i32, %arg1: memref<1xi32, #tpu.memory_space<smem>>) -> (i32, i32) {
    %c0_i32 = arith.constant 0 : i32
    %c0_i32_0 = arith.constant 0 : i32
    %c0_i32_1 = arith.constant 0 : i32
    return %c0_i32, %c0_i32_0 : i32, i32
  }
  func.func @transform_11(%arg0: i32, %arg1: memref<1xi32, #tpu.memory_space<smem>>) -> (i32, i32) {
    %c0_i32 = arith.constant 0 : i32
    %c0_i32_0 = arith.constant 0 : i32
    %c0_i32_1 = arith.constant 0 : i32
    return %c0_i32, %c0_i32_0 : i32, i32
  }
  func.func @transform_12(%arg0: i32, %arg1: memref<1xi32, #tpu.memory_space<smem>>) -> (i32, i32) {
    %c0_i32 = arith.constant 0 : i32
    %c0_i32_0 = arith.constant 0 : i32
    %c0_i32_1 = arith.constant 0 : i32
    return %c0_i32, %c0_i32_0 : i32, i32
  }
  func.func @transform_13(%arg0: i32, %arg1: memref<1xi32, #tpu.memory_space<smem>>) -> (i32, i32) {
    %c0_i32 = arith.constant 0 : i32
    %c0_i32_0 = arith.constant 0 : i32
    %c0_i32_1 = arith.constant 0 : i32
    return %c0_i32, %c0_i32_0 : i32, i32
  }
}

</mosaic_0001>

<llo_original>
// kernel: step.1
$region0: #{step.1}
  #allocation0 [shape = 'u32[]', space=smem, size = 0x4, offset = 0x4, fixed_abs, tag = 'smem constant byte address 0x4 - core index']
  #allocation1 [shape = 'u32[144,128]{1,0:T(1,128)}', space=vmem, size = 0x12000, scoped, tag = 'internal scratch']
  #allocation2 [shape = 's32[1]{0}', space=sflag, size = 0x4, scoped, tag = 'scoped memory for step.1']
  #allocation3 [shape = 's32[1]{0:T(128)S(6)}', space=smem, size = 0x200, scoped, tag = 'prefetched SMEM operand 0']
  %s0 = inlined_call_operand.<no memory space> [shape: s32[1], index: 0, kind: input, shape index: {}]
  %s1 = inlined_call_operand.vmem [shape: f32[40,1,128], index: 1, kind: input, shape index: {}]
  %s2 = inlined_call_operand.vmem [shape: f32[1,128], index: 2, kind: input, shape index: {}]
  %s3 = inlined_call_operand.vmem [shape: f32[128,128], index: 3, kind: input, shape index: {}]
  %s4 = inlined_call_operand.vmem [shape: bf16[256,128], index: 4, kind: input, shape index: {}]
  %s5 = inlined_call_operand.vmem [shape: f32[1,128], index: 5, kind: input, shape index: {}]
  %s6 = inlined_call_operand.vmem [shape: bf16[256,128], index: 6, kind: input, shape index: {}]
  %s7 = inlined_call_operand.hbm [shape: f32[1,128], index: 7, kind: input, shape index: {}]
  %s8 = inlined_call_operand.hbm [shape: bf16[256,512], index: 8, kind: input, shape index: {}]
  %s9 = inlined_call_operand.hbm [shape: f32[1,512], index: 9, kind: input, shape index: {}]
  %s10 = inlined_call_operand.hbm [shape: bf16[128,128], index: 10, kind: input, shape index: {}]
  %s11 = inlined_call_operand.hbm [shape: f32[1,128], index: 11, kind: input, shape index: {}]
  %s12 = inlined_call_operand.hbm [shape: f32[1,128], index: 12, kind: output, shape index: {0}]
  %s13 = inlined_call_operand.vmem [shape: f32[1,128], index: 13, kind: output, shape index: {1}]
  %s14 = inlined_call_operand.hbm [shape: f32[1,128], index: 14, kind: output, shape index: {2}]
  %15 = xla_tuple %s12, %s13, %s14
  %s16 = sld [smem:[#allocation0]]
  $region90: #{step.1} parent=0
    _
  %s18 = ssub.s32 1, %s16
  %s19 = scalar_select 0, %s18, %s16
  %20 = sst [smem:[#allocation3]] %s0
  $region1: #{step.1} parent=0
    #allocation4 [shape = 'u8[512]{0}', space=vmem, size = 0x400, scoped, tag = 'input window, operand 7, single buffered']
    #allocation5 [shape = 's32[1]{0}', space=sflag, size = 0x4, scoped, tag = 'scoped memory for step.1']
    #allocation6 [shape = 's32[1]{0}', space=sflag, size = 0x4, scoped, tag = 'scoped memory for step.1']
    #allocation7 [shape = 'u8[262144]{0}', space=vmem, size = 0x40000, scoped, tag = 'input window, operand 8, single buffered']
    #allocation8 [shape = 's32[1]{0}', space=sflag, size = 0x4, scoped, tag = 'scoped memory for step.1']
    #allocation9 [shape = 'u8[2048]{0}', space=vmem, size = 0x800, scoped, tag = 'input window, operand 9, single buffered']
    #allocation10 [shape = 'u8[32768]{0}', space=vmem, size = 0x8000, scoped, tag = 'input window, operand 10, single buffered']
    #allocation11 [shape = 's32[1]{0}', space=sflag, size = 0x4, scoped, tag = 'scoped memory for step.1']
    #allocation12 [shape = 'u8[512]{0}', space=vmem, size = 0x400, scoped, tag = 'input window, operand 11, single buffered']
    #allocation13 [shape = 'u8[512]{0}', space=vmem, size = 0x400, scoped, tag = 'output window, operand 0, single buffered']
    #allocation14 [shape = 'u8[512]{0}', space=vmem, size = 0x400, scoped, tag = 'output window, operand 2, single buffered']
    #allocation15 [shape = 's32[1]{0}', space=sflag, size = 0x4, scoped, tag = 'scoped memory for step.1']
    %21 = vsyncpa [#allocation5], 0
    %22 = vsyncpa [#allocation8], 0
    %23 = vsyncpa [#allocation11], 0
    %24 = vsyncpa [#allocation6], 0
    %25 = vsyncpa [#allocation15], 0
    // Predicated region
    $region2: #{step.1} parent=1 // pred_check
      _
    $region3: #{step.1} parent=1 // pred_check_branch
      %27 = sbr.rel (0) target = $region5
    $region4: #{step.1} parent=1 // pred_region
      %s28 = sld [smem:[#allocation3]]
      %p29 = scmp.lt.s32.totalorder %s28, 39
      %s30 = scalar_select %p29, %s28, 39
      %s31 = scalar_lea.vmem %s1, %s30
      %s32 = sld [smem:[#allocation3]]
    $region5: #{step.1} parent=1 // pred_fallthru
      _
    // Predicated region
    $region6: #{step.1} parent=1 // pred_check
      _
    $region7: #{step.1} parent=1 // pred_check_branch
      %34 = sbr.rel (0) target = $region9
    $region8: #{step.1} parent=1 // pred_region
      _
    $region9: #{step.1} parent=1 // pred_fallthru
      _
    // Predicated region
    $region10: #{step.1} parent=1 // pred_check
      _
    $region11: #{step.1} parent=1 // pred_check_branch
      %36 = sbr.rel (0) target = $region13
    $region12: #{step.1} parent=1 // pred_region
      _
    $region13: #{step.1} parent=1 // pred_fallthru
      _
    // Predicated region
    $region14: #{step.1} parent=1 // pred_check
      _
    $region15: #{step.1} parent=1 // pred_check_branch
      %38 = sbr.rel (0) target = $region17
    $region16: #{step.1} parent=1 // pred_region
      _
    $region17: #{step.1} parent=1 // pred_fallthru
      _
    // Predicated region
    $region18: #{step.1} parent=1 // pred_check
      _
    $region19: #{step.1} parent=1 // pred_check_branch
      %40 = sbr.rel (0) target = $region21
    $region20: #{step.1} parent=1 // pred_region
      _
    $region21: #{step.1} parent=1 // pred_fallthru
      _
    // Predicated region
    $region22: #{step.1} parent=1 // pred_check
      _
    $region23: #{step.1} parent=1 // pred_check_branch
      %42 = sbr.rel (0) target = $region25
    $region24: #{step.1} parent=1 // pred_region
      _
    $region25: #{step.1} parent=1 // pred_fallthru
      _
    // Predicated region
    $region26: #{step.1} parent=1 // pred_check
      _
    $region27: #{step.1} parent=1 // pred_check_branch
      %44 = sbr.rel (0) target = $region29
    $region28: #{step.1} parent=1 // pred_region
      %s46 = ssub.s32 16, 16
      %47 = vsyncadd [#allocation5], %s46
      %s49 = sshll.u32 [#allocation4], 4
      %s50 = int_to_ptr.vmem [resolvable:$true] %s49
      %52 = dma.hbm_to_vmem [thread:$0]  %s7, 16, %s50, [#allocation5]
    $region29: #{step.1} parent=1 // pred_fallthru
      _
    // Predicated region
    $region30: #{step.1} parent=1 // pred_check
      _
    $region31: #{step.1} parent=1 // pred_check_branch
      %54 = sbr.rel (0) target = $region33
    $region32: #{step.1} parent=1 // pred_region
      %s56 = ssub.s32 8192, 8192
      %57 = vsyncadd [#allocation8], %s56
      %s58 = sshll.u32 [#allocation7], 4
      %s59 = int_to_ptr.vmem [resolvable:$true] %s58
      %64 = dma.hbm_to_vmem [thread:$0]  %s8, 8192, %s59, [#allocation8], 256, 256, 16
    $region33: #{step.1} parent=1 // pred_fallthru
      _
    // Predicated region
    $region34: #{step.1} parent=1 // pred_check
      _
    $region35: #{step.1} parent=1 // pred_check_branch
      %66 = sbr.rel (0) target = $region37
    $region36: #{step.1} parent=1 // pred_region
      %s68 = ssub.s32 64, 64
      %69 = vsyncadd [#allocation8], %s68
      %s71 = sshll.u32 [#allocation9], 4
      %s72 = int_to_ptr.vmem [resolvable:$true] %s71
      %74 = dma.hbm_to_vmem [thread:$0]  %s9, 64, %s72, [#allocation8]
    $region37: #{step.1} parent=1 // pred_fallthru
      _
    // Predicated region
    $region38: #{step.1} parent=1 // pred_check
      _
    $region39: #{step.1} parent=1 // pred_check_branch
      %76 = sbr.rel (0) target = $region41
    $region40: #{step.1} parent=1 // pred_region
      %s78 = ssub.s32 1024, 1024
      %79 = vsyncadd [#allocation11], %s78
      %s80 = sshll.u32 [#allocation10], 4
      %s81 = int_to_ptr.vmem [resolvable:$true] %s80
      %86 = dma.hbm_to_vmem [thread:$0]  %s10, 1024, %s81, [#allocation11], 64, 64, 4
    $region41: #{step.1} parent=1 // pred_fallthru
      _
    // Predicated region
    $region42: #{step.1} parent=1 // pred_check
      _
    $region43: #{step.1} parent=1 // pred_check_branch
      %88 = sbr.rel (0) target = $region45
    $region44: #{step.1} parent=1 // pred_region
      %s90 = ssub.s32 16, 16
      %91 = vsyncadd [#allocation11], %s90
      %s93 = sshll.u32 [#allocation12], 4
      %s94 = int_to_ptr.vmem [resolvable:$true] %s93
      %96 = dma.hbm_to_vmem [thread:$0]  %s11, 16, %s94, [#allocation11]
    $region45: #{step.1} parent=1 // pred_fallthru
      _
    // Predicated region
    $region46: #{step.1} parent=1 // pred_check
      _
    $region47: #{step.1} parent=1 // pred_check_branch
      %98 = sbr.rel (0) target = $region49
    $region48: #{step.1} parent=1 // pred_region
      %99 = dma.done [#allocation5], 16
    $region49: #{step.1} parent=1 // pred_fallthru
      _
    // Predicated region
    $region50: #{step.1} parent=1 // pred_check
      _
    $region51: #{step.1} parent=1 // pred_check_branch
      %101 = sbr.rel (0) target = $region53
    $region52: #{step.1} parent=1 // pred_region
      %102 = dma.done [#allocation8], 8192
    $region53: #{step.1} parent=1 // pred_fallthru
      _
    // Predicated region
    $region54: #{step.1} parent=1 // pred_check
      _
    $region55: #{step.1} parent=1 // pred_check_branch
      %104 = sbr.rel (0) target = $region57
    $region56: #{step.1} parent=1 // pred_region
      %105 = dma.done [#allocation8], 64
    $region57: #{step.1} parent=1 // pred_fallthru
      _
    // Predicated region
    $region58: #{step.1} parent=1 // pred_check
      _
    $region59: #{step.1} parent=1 // pred_check_branch
      %107 = sbr.rel (0) target = $region61
    $region60: #{step.1} parent=1 // pred_region
      %108 = dma.done [#allocation11], 1024
    $region61: #{step.1} parent=1 // pred_fallthru
      _
    // Predicated region
    $region62: #{step.1} parent=1 // pred_check
      _
    $region63: #{step.1} parent=1 // pred_check_branch
      %110 = sbr.rel (0) target = $region65
    $region64: #{step.1} parent=1 // pred_region
      %111 = dma.done [#allocation11], 16
    $region65: #{step.1} parent=1 // pred_fallthru
      _
    %s112 = sld [smem:[#allocation3]]
    %p113 = scmp.lt.s32.totalorder %s112, 39
    %s114 = scalar_select %p113, %s112, 39
    %s115 = scalar_lea.vmem %s1, %s114
    %s116 = sld [smem:[#allocation3]]
    %p117 = scmp.lt.s32.totalorder %s116, 39
    %s118 = scalar_select %p117, %s116, 39
    %s119 = scalar_lea.vmem %s1, %s118
    %s120 = sld [smem:[#allocation3]]
    %v122 = vld [vmem:[%s119] sm:$0x1]
    %v123 = vpack.c.bf16 %v122, %v122
    %v124 = vld [vmem:[%s2] sm:$0x1]
    %v125 = vpack.c.bf16 %v124, %v124
    %v126 = vld [vmem:[%s4] sm:$0xf]
    %v127 = vld [vmem:[%s4 + $0x4] sm:$0xf]
    %v128 = vld [vmem:[%s4 + $0x8] sm:$0xf]
    %v129 = vld [vmem:[%s4 + $0xc] sm:$0xf]
    %v130 = vld [vmem:[%s4 + $0x10] sm:$0xf]
    %v131 = vld [vmem:[%s4 + $0x14] sm:$0xf]
    %v132 = vld [vmem:[%s4 + $0x18] sm:$0xf]
    %v133 = vld [vmem:[%s4 + $0x1c] sm:$0xf]
    %v134 = vld [vmem:[%s4 + $0x20] sm:$0xf]
    %v135 = vld [vmem:[%s4 + $0x24] sm:$0xf]
    %v136 = vld [vmem:[%s4 + $0x28] sm:$0xf]
    %v137 = vld [vmem:[%s4 + $0x2c] sm:$0xf]
    %v138 = vld [vmem:[%s4 + $0x30] sm:$0xf]
    %v139 = vld [vmem:[%s4 + $0x34] sm:$0xf]
    %v140 = vld [vmem:[%s4 + $0x38] sm:$0xf]
    %v141 = vld [vmem:[%s4 + $0x3c] sm:$0xf]
    %v142 = vld [vmem:[%s4 + $0x40] sm:$0xf]
    %v143 = vld [vmem:[%s4 + $0x44] sm:$0xf]
    %v144 = vld [vmem:[%s4 + $0x48] sm:$0xf]
    %v145 = vld [vmem:[%s4 + $0x4c] sm:$0xf]
    %v146 = vld [vmem:[%s4 + $0x50] sm:$0xf]
    %v147 = vld [vmem:[%s4 + $0x54] sm:$0xf]
    %v148 = vld [vmem:[%s4 + $0x58] sm:$0xf]
    %v149 = vld [vmem:[%s4 + $0x5c] sm:$0xf]
    %v150 = vld [vmem:[%s4 + $0x60] sm:$0xf]
    %v151 = vld [vmem:[%s4 + $0x64] sm:$0xf]
    %v152 = vld [vmem:[%s4 + $0x68] sm:$0xf]
    %v153 = vld [vmem:[%s4 + $0x6c] sm:$0xf]
    %v154 = vld [vmem:[%s4 + $0x70] sm:$0xf]
    %v155 = vld [vmem:[%s4 + $0x74] sm:$0xf]
    %v156 = vld [vmem:[%s4 + $0x78] sm:$0xf]
    %v157 = vld [vmem:[%s4 + $0x7c] sm:$0xf]
    %v158 = vld [vmem:[%s5] sm:$0x1]
    %v191 = vunpack.c.l.b16 %v126
    %v192 = vunpack.c.l.b16 %v127
    %v193 = vunpack.c.l.b16 %v128
    %v194 = vunpack.c.l.b16 %v129
    %v195 = vunpack.c.l.b16 %v130
    %v196 = vunpack.c.l.b16 %v131
    %v197 = vunpack.c.l.b16 %v132
    %v198 = vunpack.c.l.b16 %v133
    %v199 = vunpack.c.l.b16 %v134
    %v200 = vunpack.c.l.b16 %v135
    %v201 = vunpack.c.l.b16 %v136
    %v202 = vunpack.c.l.b16 %v137
    %v203 = vunpack.c.l.b16 %v138
    %v204 = vunpack.c.l.b16 %v139
    %v205 = vunpack.c.l.b16 %v140
    %v206 = vunpack.c.l.b16 %v141
    %v207 = vunpack.c.l.b16 %v142
    %v208 = vunpack.c.l.b16 %v143
    %v209 = vunpack.c.l.b16 %v144
    %v210 = vunpack.c.l.b16 %v145
    %v211 = vunpack.c.l.b16 %v146
    %v212 = vunpack.c.l.b16 %v147
    %v213 = vunpack.c.l.b16 %v148
    %v214 = vunpack.c.l.b16 %v149
    %v215 = vunpack.c.l.b16 %v150
    %v216 = vunpack.c.l.b16 %v151
    %v217 = vunpack.c.l.b16 %v152
    %v218 = vunpack.c.l.b16 %v153
    %v219 = vunpack.c.l.b16 %v154
    %v220 = vunpack.c.l.b16 %v155
    %v221 = vunpack.c.l.b16 %v156
    %v222 = vunpack.c.l.b16 %v157
    %v223 = vpack.c.b16 %v192, %v191
    %v224 = vpack.c.b16 %v194, %v193
    %v225 = vpack.c.b16 %v196, %v195
    %v226 = vpack.c.b16 %v198, %v197
    %v227 = vpack.c.b16 %v200, %v199
    %v228 = vpack.c.b16 %v202, %v201
    %v229 = vpack.c.b16 %v204, %v203
    %v230 = vpack.c.b16 %v206, %v205
    %v231 = vpack.c.b16 %v208, %v207
    %v232 = vpack.c.b16 %v210, %v209
    %v233 = vpack.c.b16 %v212, %v211
    %v234 = vpack.c.b16 %v214, %v213
    %v235 = vpack.c.b16 %v216, %v215
    %v236 = vpack.c.b16 %v218, %v217
    %v237 = vpack.c.b16 %v220, %v219
    %v238 = vpack.c.b16 %v222, %v221
    %255 = vmatprep.subr.bf16.mxu0 0
    %256 = vmatpush1.bf16.msra.mxu0 %v230
    %257 = vmatprep.subr.bf16.mxu0 0
    %258 = vmatpush1.bf16.msra.mxu0 %v229
    %259 = vmatprep.subr.bf16.mxu0 0
    %260 = vmatpush1.bf16.msra.mxu0 %v228
    %261 = vmatprep.subr.bf16.mxu0 0
    %262 = vmatpush1.bf16.msra.mxu0 %v227
    %263 = vmatprep.subr.bf16.mxu0 0
    %264 = vmatpush1.bf16.msra.mxu0 %v226
    %265 = vmatprep.subr.bf16.mxu0 0
    %266 = vmatpush1.bf16.msra.mxu0 %v225
    %267 = vmatprep.subr.bf16.mxu0 0
    %268 = vmatpush1.bf16.msra.mxu0 %v224
    %269 = vmatprep.subr.bf16.mxu0 0
    %270 = vmatpush1.bf16.msra.mxu0 %v223
    %271 = vmatprep.subr.bf16.mxu0 0
    %272 = vmatpush2.bf16.msra.mxu0 %v238
    %273 = vmatprep.subr.bf16.mxu0 0
    %274 = vmatpush2.bf16.msra.mxu0 %v237
    %275 = vmatprep.subr.bf16.mxu0 0
    %276 = vmatpush2.bf16.msra.mxu0 %v236
    %277 = vmatprep.subr.bf16.mxu0 0
    %278 = vmatpush2.bf16.msra.mxu0 %v235
    %279 = vmatprep.subr.bf16.mxu0 0
    %280 = vmatpush2.bf16.msra.mxu0 %v234
    %281 = vmatprep.subr.bf16.mxu0 0
    %282 = vmatpush2.bf16.msra.mxu0 %v233
    %283 = vmatprep.subr.bf16.mxu0 0
    %284 = vmatpush2.bf16.msra.mxu0 %v232
    %285 = vmatprep.subr.bf16.mxu0 0
    %286 = vmatpush2.bf16.msra.mxu0 %v231
    %287 = vmatprep.mubr.bf16.mxu0 %v125
    %288 = vmatmul.mubr.bf16.gmra.mxu0 %v123
    %v289 = vpop.f32.mrf.mxu0
    %v290 = vadd.f32 %v158, %v289
    %v291 = vpop.f32.mrf.mxu0
    %v292 = vpop.f32.mrf.mxu0
    %v293 = vpop.f32.mrf.mxu0
    %294 = vdwg.mxu0
    %v295 = vlaneseq
    %v296 = vand.u32 %v295, 127
    %vm297 = vcmp.lt.s32.totalorder %v296, 50
    %v298 = vsel %vm297, %v290, -inf
    %vm299 = vcmask 1040384
    %v300 = vsel %vm299, %v298, -inf
    %301 = vmax.xlane.f32.xlu0 %v300
    %v302 = vpop.xlane.xlu0 %301
    %v303 = vsub.f32 %v298, %v302
    %v304 = vmul.f32 %v303, 1.442695
    %v305 = vpow.pop %v304
    %v306 = vsel %vm299, %v305, 0.0
    %307 = vadd.xlane.f32.xlu0 %v306
    %v308 = vpop.xlane.xlu0 %307
    %v309 = vrcp.pop %v308
    %v310 = vmul.f32 %v305, %v309
    %v311 = vld [vmem:[%s3] sm:$0xff]
    %v312 = vld [vmem:[%s3 + $0x8] sm:$0xff]
    %v313 = vld [vmem:[%s3 + $0x10] sm:$0xff]
    %v314 = vld [vmem:[%s3 + $0x18] sm:$0xff]
    %v315 = vld [vmem:[%s3 + $0x20] sm:$0xff]
    %v316 = vld [vmem:[%s3 + $0x28] sm:$0xff]
    %v317 = vld [vmem:[%s3 + $0x30] sm:$0xff]
    %v318 = vld [vmem:[%s3 + $0x38] sm:$0xff]
    %v319 = vld [vmem:[%s3 + $0x40] sm:$0xff]
    %v320 = vld [vmem:[%s3 + $0x48] sm:$0xff]
    %v321 = vld [vmem:[%s3 + $0x50] sm:$0xff]
    %v322 = vld [vmem:[%s3 + $0x58] sm:$0xff]
    %v323 = vld [vmem:[%s3 + $0x60] sm:$0xff]
    %v324 = vld [vmem:[%s3 + $0x68] sm:$0xff]
    %v325 = vld [vmem:[%s3 + $0x70] sm:$0xff]
    %v326 = vld [vmem:[%s3 + $0x78] sm:$0xff]
    %327 = vmatprep.subr.mxu0 0.0
    %328 = vmatpush1.msra.mxu0 %v326
    %329 = vmatprep.subr.mxu0 0.0
    %330 = vmatpush1.msra.mxu0 %v325
    %331 = vmatprep.subr.mxu0 0.0
    %332 = vmatpush1.msra.mxu0 %v324
    %333 = vmatprep.subr.mxu0 0.0
    %334 = vmatpush1.msra.mxu0 %v323
    %335 = vmatprep.subr.mxu0 0.0
    %336 = vmatpush1.msra.mxu0 %v322
    %337 = vmatprep.subr.mxu0 0.0
    %338 = vmatpush1.msra.mxu0 %v321
    %339 = vmatprep.subr.mxu0 0.0
    %340 = vmatpush1.msra.mxu0 %v320
    %341 = vmatprep.subr.mxu0 0.0
    %342 = vmatpush1.msra.mxu0 %v319
    %343 = vmatprep.subr.mxu0 0.0
    %344 = vmatpush1.msra.mxu0 %v318
    %345 = vmatprep.subr.mxu0 0.0
    %346 = vmatpush1.msra.mxu0 %v317
    %347 = vmatprep.subr.mxu0 0.0
    %348 = vmatpush1.msra.mxu0 %v316
    %349 = vmatprep.subr.mxu0 0.0
    %350 = vmatpush1.msra.mxu0 %v315
    %351 = vmatprep.subr.mxu0 0.0
    %352 = vmatpush1.msra.mxu0 %v314
    %353 = vmatprep.subr.mxu0 0.0
    %354 = vmatpush1.msra.mxu0 %v313
    %355 = vmatprep.subr.mxu0 0.0
    %356 = vmatpush1.msra.mxu0 %v312
    %357 = vmatprep.subr.mxu0 0.0
    %358 = vmatpush1.msra.mxu0 %v311
    %359 = vmatprep.subr.mxu0 0.0
    %360 = vmatpush2.msra.mxu0 0.0
    %361 = vmatprep.subr.mxu0 0.0
    %362 = vmatpush2.msra.mxu0 0.0
    %363 = vmatprep.subr.mxu0 0.0
    %364 = vmatpush2.msra.mxu0 0.0
    %365 = vmatprep.subr.mxu0 0.0
    %366 = vmatpush2.msra.mxu0 0.0
    %367 = vmatprep.subr.mxu0 0.0
    %368 = vmatpush2.msra.mxu0 0.0
    %369 = vmatprep.subr.mxu0 0.0
    %370 = vmatpush2.msra.mxu0 0.0
    %371 = vmatprep.subr.mxu0 0.0
    %372 = vmatpush2.msra.mxu0 0.0
    %373 = vmatprep.subr.mxu0 0.0
    %374 = vmatpush2.msra.mxu0 0.0
    %375 = vmatprep.subr.mxu0 0.0
    %376 = vmatpush2.msra.mxu0 0.0
    %377 = vmatprep.subr.mxu0 0.0
    %378 = vmatpush2.msra.mxu0 0.0
    %379 = vmatprep.subr.mxu0 0.0
    %380 = vmatpush2.msra.mxu0 0.0
    %381 = vmatprep.subr.mxu0 0.0
    %382 = vmatpush2.msra.mxu0 0.0
    %383 = vmatprep.subr.mxu0 0.0
    %384 = vmatpush2.msra.mxu0 0.0
    %385 = vmatprep.subr.mxu0 0.0
    %386 = vmatpush2.msra.mxu0 0.0
    %387 = vmatprep.subr.mxu0 0.0
    %388 = vmatpush2.msra.mxu0 0.0
    %389 = vmatprep.subr.mxu0 0.0
    %390 = vmatpush2.msra.mxu0 0.0
    %391 = vmatprep.mubr.f32.mxu0 0.0
    %392 = vmatmul.mubr.f32.gmra.mxu0 %v310
    %v393 = vpop.f32.mrf.mxu0
    %v394 = vadd.f32 0.0, %v393
    %v395 = vpop.f32.mrf.mxu0
    %396 = vdwg.mxu0
    %v397 = vpack.c.bf16 %v394, %v394
    %v398 = vld [vmem:[%s6] sm:$0xf]
    %v399 = vld [vmem:[%s6 + $0x4] sm:$0xf]
    %v400 = vld [vmem:[%s6 + $0x8] sm:$0xf]
    %v401 = vld [vmem:[%s6 + $0xc] sm:$0xf]
    %v402 = vld [vmem:[%s6 + $0x10] sm:$0xf]
    %v403 = vld [vmem:[%s6 + $0x14] sm:$0xf]
    %v404 = vld [vmem:[%s6 + $0x18] sm:$0xf]
    %v405 = vld [vmem:[%s6 + $0x1c] sm:$0xf]
    %v406 = vld [vmem:[%s6 + $0x20] sm:$0xf]
    %v407 = vld [vmem:[%s6 + $0x24] sm:$0xf]
    %v408 = vld [vmem:[%s6 + $0x28] sm:$0xf]
    %v409 = vld [vmem:[%s6 + $0x2c] sm:$0xf]
    %v410 = vld [vmem:[%s6 + $0x30] sm:$0xf]
    %v411 = vld [vmem:[%s6 + $0x34] sm:$0xf]
    %v412 = vld [vmem:[%s6 + $0x38] sm:$0xf]
    %v413 = vld [vmem:[%s6 + $0x3c] sm:$0xf]
    %v414 = vld [vmem:[%s6 + $0x40] sm:$0xf]
    %v415 = vld [vmem:[%s6 + $0x44] sm:$0xf]
    %v416 = vld [vmem:[%s6 + $0x48] sm:$0xf]
    %v417 = vld [vmem:[%s6 + $0x4c] sm:$0xf]
    %v418 = vld [vmem:[%s6 + $0x50] sm:$0xf]
    %v419 = vld [vmem:[%s6 + $0x54] sm:$0xf]
    %v420 = vld [vmem:[%s6 + $0x58] sm:$0xf]
    %v421 = vld [vmem:[%s6 + $0x5c] sm:$0xf]
    %v422 = vld [vmem:[%s6 + $0x60] sm:$0xf]
    %v423 = vld [vmem:[%s6 + $0x64] sm:$0xf]
    %v424 = vld [vmem:[%s6 + $0x68] sm:$0xf]
    %v425 = vld [vmem:[%s6 + $0x6c] sm:$0xf]
    %v426 = vld [vmem:[%s6 + $0x70] sm:$0xf]
    %v427 = vld [vmem:[%s6 + $0x74] sm:$0xf]
    %v428 = vld [vmem:[%s6 + $0x78] sm:$0xf]
    %v429 = vld [vmem:[%s6 + $0x7c] sm:$0xf]
    %v430 = vld [vmem:[#allocation4] sm:$0x1]
    %v463 = vunpack.c.l.b16 %v398
    %v464 = vunpack.c.l.b16 %v399
    %v465 = vunpack.c.l.b16 %v400
    %v466 = vunpack.c.l.b16 %v401
    %v467 = vunpack.c.l.b16 %v402
    %v468 = vunpack.c.l.b16 %v403
    %v469 = vunpack.c.l.b16 %v404
    %v470 = vunpack.c.l.b16 %v405
    %v471 = vunpack.c.l.b16 %v406
    %v472 = vunpack.c.l.b16 %v407
    %v473 = vunpack.c.l.b16 %v408
    %v474 = vunpack.c.l.b16 %v409
    %v475 = vunpack.c.l.b16 %v410
    %v476 = vunpack.c.l.b16 %v411
    %v477 = vunpack.c.l.b16 %v412
    %v478 = vunpack.c.l.b16 %v413
    %v479 = vunpack.c.l.b16 %v414
    %v480 = vunpack.c.l.b16 %v415
    %v481 = vunpack.c.l.b16 %v416
    %v482 = vunpack.c.l.b16 %v417
    %v483 = vunpack.c.l.b16 %v418
    %v484 = vunpack.c.l.b16 %v419
    %v485 = vunpack.c.l.b16 %v420
    %v486 = vunpack.c.l.b16 %v421
    %v487 = vunpack.c.l.b16 %v422
    %v488 = vunpack.c.l.b16 %v423
    %v489 = vunpack.c.l.b16 %v424
    %v490 = vunpack.c.l.b16 %v425
    %v491 = vunpack.c.l.b16 %v426
    %v492 = vunpack.c.l.b16 %v427
    %v493 = vunpack.c.l.b16 %v428
    %v494 = vunpack.c.l.b16 %v429
    %v495 = vpack.c.b16 %v464, %v463
    %v496 = vpack.c.b16 %v466, %v465
    %v497 = vpack.c.b16 %v468, %v467
    %v498 = vpack.c.b16 %v470, %v469
    %v499 = vpack.c.b16 %v472, %v471
    %v500 = vpack.c.b16 %v474, %v473
    %v501 = vpack.c.b16 %v476, %v475
    %v502 = vpack.c.b16 %v478, %v477
    %v503 = vpack.c.b16 %v480, %v479
    %v504 = vpack.c.b16 %v482, %v481
    %v505 = vpack.c.b16 %v484, %v483
    %v506 = vpack.c.b16 %v486, %v485
    %v507 = vpack.c.b16 %v488, %v487
    %v508 = vpack.c.b16 %v490, %v489
    %v509 = vpack.c.b16 %v492, %v491
    %v510 = vpack.c.b16 %v494, %v493
    %527 = vmatprep.subr.bf16.mxu0 0
    %528 = vmatpush1.bf16.msra.mxu0 %v502
    %529 = vmatprep.subr.bf16.mxu0 0
    %530 = vmatpush1.bf16.msra.mxu0 %v501
    %531 = vmatprep.subr.bf16.mxu0 0
    %532 = vmatpush1.bf16.msra.mxu0 %v500
    %533 = vmatprep.subr.bf16.mxu0 0
    %534 = vmatpush1.bf16.msra.mxu0 %v499
    %535 = vmatprep.subr.bf16.mxu0 0
    %536 = vmatpush1.bf16.msra.mxu0 %v498
    %537 = vmatprep.subr.bf16.mxu0 0
    %538 = vmatpush1.bf16.msra.mxu0 %v497
    %539 = vmatprep.subr.bf16.mxu0 0
    %540 = vmatpush1.bf16.msra.mxu0 %v496
    %541 = vmatprep.subr.bf16.mxu0 0
    %542 = vmatpush1.bf16.msra.mxu0 %v495
    %543 = vmatprep.subr.bf16.mxu0 0
    %544 = vmatpush2.bf16.msra.mxu0 %v510
    %545 = vmatprep.subr.bf16.mxu0 0
    %546 = vmatpush2.bf16.msra.mxu0 %v509
    %547 = vmatprep.subr.bf16.mxu0 0
    %548 = vmatpush2.bf16.msra.mxu0 %v508
    %549 = vmatprep.subr.bf16.mxu0 0
    %550 = vmatpush2.bf16.msra.mxu0 %v507
    %551 = vmatprep.subr.bf16.mxu0 0
    %552 = vmatpush2.bf16.msra.mxu0 %v506
    %553 = vmatprep.subr.bf16.mxu0 0
    %554 = vmatpush2.bf16.msra.mxu0 %v505
    %555 = vmatprep.subr.bf16.mxu0 0
    %556 = vmatpush2.bf16.msra.mxu0 %v504
    %557 = vmatprep.subr.bf16.mxu0 0
    %558 = vmatpush2.bf16.msra.mxu0 %v503
    %559 = vmatprep.mubr.bf16.mxu0 %v397
    %560 = vmatmul.mubr.bf16.gmra.mxu0 %v123
    %v561 = vpop.f32.mrf.mxu0
    %v562 = vadd.f32 %v430, %v561
    %v563 = vpop.f32.mrf.mxu0
    %v564 = vpop.f32.mrf.mxu0
    %v565 = vpop.f32.mrf.mxu0
    %566 = vdwg.mxu0
    %v567 = vmax.f32 %v562, 0.0
    %v568 = vpack.c.bf16 %v567, %v567
    %v569 = vld [vmem:[#allocation7] sm:$0xff]
    %v570 = vld [vmem:[#allocation7 + $0x8] sm:$0xff]
    %v571 = vld [vmem:[#allocation7 + $0x10] sm:$0xff]
    %v572 = vld [vmem:[#allocation7 + $0x18] sm:$0xff]
    %v573 = vld [vmem:[#allocation7 + $0x20] sm:$0xff]
    %v574 = vld [vmem:[#allocation7 + $0x28] sm:$0xff]
    %v575 = vld [vmem:[#allocation7 + $0x30] sm:$0xff]
    %v576 = vld [vmem:[#allocation7 + $0x38] sm:$0xff]
    %v577 = vld [vmem:[#allocation7 + $0x40] sm:$0xff]
    %v578 = vld [vmem:[#allocation7 + $0x48] sm:$0xff]
    %v579 = vld [vmem:[#allocation7 + $0x50] sm:$0xff]
    %v580 = vld [vmem:[#allocation7 + $0x58] sm:$0xff]
    %v581 = vld [vmem:[#allocation7 + $0x60] sm:$0xff]
    %v582 = vld [vmem:[#allocation7 + $0x68] sm:$0xff]
    %v583 = vld [vmem:[#allocation7 + $0x70] sm:$0xff]
    %v584 = vld [vmem:[#allocation7 + $0x78] sm:$0xff]
    %v585 = vld [vmem:[#allocation7 + $0x80] sm:$0xff]
    %v586 = vld [vmem:[#allocation7 + $0x88] sm:$0xff]
    %v587 = vld [vmem:[#allocation7 + $0x90] sm:$0xff]
    %v588 = vld [vmem:[#allocation7 + $0x98] sm:$0xff]
    %v589 = vld [vmem:[#allocation7 + $0xa0] sm:$0xff]
    %v590 = vld [vmem:[#allocation7 + $0xa8] sm:$0xff]
    %v591 = vld [vmem:[#allocation7 + $0xb0] sm:$0xff]
    %v592 = vld [vmem:[#allocation7 + $0xb8] sm:$0xff]
    %v593 = vld [vmem:[#allocation7 + $0xc0] sm:$0xff]
    %v594 = vld [vmem:[#allocation7 + $0xc8] sm:$0xff]
    %v595 = vld [vmem:[#allocation7 + $0xd0] sm:$0xff]
    %v596 = vld [vmem:[#allocation7 + $0xd8] sm:$0xff]
    %v597 = vld [vmem:[#allocation7 + $0xe0] sm:$0xff]
    %v598 = vld [vmem:[#allocation7 + $0xe8] sm:$0xff]
    %v599 = vld [vmem:[#allocation7 + $0xf0] sm:$0xff]
    %v600 = vld [vmem:[#allocation7 + $0xf8] sm:$0xff]
    %v601 = vld [vmem:[#allocation7 + $0x100] sm:$0xff]
    %v602 = vld [vmem:[#allocation7 + $0x108] sm:$0xff]
    %v603 = vld [vmem:[#allocation7 + $0x110] sm:$0xff]
    %v604 = vld [vmem:[#allocation7 + $0x118] sm:$0xff]
    %v605 = vld [vmem:[#allocation7 + $0x120] sm:$0xff]
    %v606 = vld [vmem:[#allocation7 + $0x128] sm:$0xff]
    %v607 = vld [vmem:[#allocation7 + $0x130] sm:$0xff]
    %v608 = vld [vmem:[#allocation7 + $0x138] sm:$0xff]
    %v609 = vld [vmem:[#allocation7 + $0x140] sm:$0xff]
    %v610 = vld [vmem:[#allocation7 + $0x148] sm:$0xff]
    %v611 = vld [vmem:[#allocation7 + $0x150] sm:$0xff]
    %v612 = vld [vmem:[#allocation7 + $0x158] sm:$0xff]
    %v613 = vld [vmem:[#allocation7 + $0x160] sm:$0xff]
    %v614 = vld [vmem:[#allocation7 + $0x168] sm:$0xff]
    %v615 = vld [vmem:[#allocation7 + $0x170] sm:$0xff]
    %v616 = vld [vmem:[#allocation7 + $0x178] sm:$0xff]
    %v617 = vld [vmem:[#allocation7 + $0x180] sm:$0xff]
    %v618 = vld [vmem:[#allocation7 + $0x188] sm:$0xff]
    %v619 = vld [vmem:[#allocation7 + $0x190] sm:$0xff]
    %v620 = vld [vmem:[#allocation7 + $0x198] sm:$0xff]
    %v621 = vld [vmem:[#allocation7 + $0x1a0] sm:$0xff]
    %v622 = vld [vmem:[#allocation7 + $0x1a8] sm:$0xff]
    %v623 = vld [vmem:[#allocation7 + $0x1b0] sm:$0xff]
    %v624 = vld [vmem:[#allocation7 + $0x1b8] sm:$0xff]
    %v625 = vld [vmem:[#allocation7 + $0x1c0] sm:$0xff]
    %v626 = vld [vmem:[#allocation7 + $0x1c8] sm:$0xff]
    %v627 = vld [vmem:[#allocation7 + $0x1d0] sm:$0xff]
    %v628 = vld [vmem:[#allocation7 + $0x1d8] sm:$0xff]
    %v629 = vld [vmem:[#allocation7 + $0x1e0] sm:$0xff]
    %v630 = vld [vmem:[#allocation7 + $0x1e8] sm:$0xff]
    %v631 = vld [vmem:[#allocation7 + $0x1f0] sm:$0xff]
    %v632 = vld [vmem:[#allocation7 + $0x1f8] sm:$0xff]
    %v633 = vld [vmem:[#allocation9] sm:$0xf]
    %v698 = vunpack.c.l.b16 %v569
    %v699 = vunpack.c.h.b16 %v569
    %v700 = vunpack.c.l.b16 %v570
    %v701 = vunpack.c.h.b16 %v570
    %v702 = vunpack.c.l.b16 %v571
    %v703 = vunpack.c.h.b16 %v571
    %v704 = vunpack.c.l.b16 %v572
    %v705 = vunpack.c.h.b16 %v572
    %v706 = vunpack.c.l.b16 %v573
    %v707 = vunpack.c.h.b16 %v573
    %v708 = vunpack.c.l.b16 %v574
    %v709 = vunpack.c.h.b16 %v574
    %v710 = vunpack.c.l.b16 %v575
    %v711 = vunpack.c.h.b16 %v575
    %v712 = vunpack.c.l.b16 %v576
    %v713 = vunpack.c.h.b16 %v576
    %v714 = vunpack.c.l.b16 %v577
    %v715 = vunpack.c.h.b16 %v577
    %v716 = vunpack.c.l.b16 %v578
    %v717 = vunpack.c.h.b16 %v578
    %v718 = vunpack.c.l.b16 %v579
    %v719 = vunpack.c.h.b16 %v579
    %v720 = vunpack.c.l.b16 %v580
    %v721 = vunpack.c.h.b16 %v580
    %v722 = vunpack.c.l.b16 %v581
    %v723 = vunpack.c.h.b16 %v581
    %v724 = vunpack.c.l.b16 %v582
    %v725 = vunpack.c.h.b16 %v582
    %v726 = vunpack.c.l.b16 %v583
    %v727 = vunpack.c.h.b16 %v583
    %v728 = vunpack.c.l.b16 %v584
    %v729 = vunpack.c.h.b16 %v584
    %v730 = vunpack.c.l.b16 %v585
    %v731 = vunpack.c.h.b16 %v585
    %v732 = vunpack.c.l.b16 %v586
    %v733 = vunpack.c.h.b16 %v586
    %v734 = vunpack.c.l.b16 %v587
    %v735 = vunpack.c.h.b16 %v587
    %v736 = vunpack.c.l.b16 %v588
    %v737 = vunpack.c.h.b16 %v588
    %v738 = vunpack.c.l.b16 %v589
    %v739 = vunpack.c.h.b16 %v589
    %v740 = vunpack.c.l.b16 %v590
    %v741 = vunpack.c.h.b16 %v590
    %v742 = vunpack.c.l.b16 %v591
    %v743 = vunpack.c.h.b16 %v591
    %v744 = vunpack.c.l.b16 %v592
    %v745 = vunpack.c.h.b16 %v592
    %v746 = vunpack.c.l.b16 %v593
    %v747 = vunpack.c.h.b16 %v593
    %v748 = vunpack.c.l.b16 %v594
    %v749 = vunpack.c.h.b16 %v594
    %v750 = vunpack.c.l.b16 %v595
    %v751 = vunpack.c.h.b16 %v595
    %v752 = vunpack.c.l.b16 %v596
    %v753 = vunpack.c.h.b16 %v596
    %v754 = vunpack.c.l.b16 %v597
    %v755 = vunpack.c.h.b16 %v597
    %v756 = vunpack.c.l.b16 %v598
    %v757 = vunpack.c.h.b16 %v598
    %v758 = vunpack.c.l.b16 %v599
    %v759 = vunpack.c.h.b16 %v599
    %v760 = vunpack.c.l.b16 %v600
    %v761 = vunpack.c.h.b16 %v600
    %v762 = vunpack.c.l.b16 %v601
    %v763 = vunpack.c.h.b16 %v601
    %v764 = vunpack.c.l.b16 %v602
    %v765 = vunpack.c.h.b16 %v602
    %v766 = vunpack.c.l.b16 %v603
    %v767 = vunpack.c.h.b16 %v603
    %v768 = vunpack.c.l.b16 %v604
    %v769 = vunpack.c.h.b16 %v604
    %v770 = vunpack.c.l.b16 %v605
    %v771 = vunpack.c.h.b16 %v605
    %v772 = vunpack.c.l.b16 %v606
    %v773 = vunpack.c.h.b16 %v606
    %v774 = vunpack.c.l.b16 %v607
    %v775 = vunpack.c.h.b16 %v607
    %v776 = vunpack.c.l.b16 %v608
    %v777 = vunpack.c.h.b16 %v608
    %v778 = vunpack.c.l.b16 %v609
    %v779 = vunpack.c.h.b16 %v609
    %v780 = vunpack.c.l.b16 %v610
    %v781 = vunpack.c.h.b16 %v610
    %v782 = vunpack.c.l.b16 %v611
    %v783 = vunpack.c.h.b16 %v611
    %v784 = vunpack.c.l.b16 %v612
    %v785 = vunpack.c.h.b16 %v612
    %v786 = vunpack.c.l.b16 %v613
    %v787 = vunpack.c.h.b16 %v613
    %v788 = vunpack.c.l.b16 %v614
    %v789 = vunpack.c.h.b16 %v614
    %v790 = vunpack.c.l.b16 %v615
    %v791 = vunpack.c.h.b16 %v615
    %v792 = vunpack.c.l.b16 %v616
    %v793 = vunpack.c.h.b16 %v616
    %v794 = vunpack.c.l.b16 %v617
    %v795 = vunpack.c.h.b16 %v617
    %v796 = vunpack.c.l.b16 %v618
    %v797 = vunpack.c.h.b16 %v618
    %v798 = vunpack.c.l.b16 %v619
    %v799 = vunpack.c.h.b16 %v619
    %v800 = vunpack.c.l.b16 %v620
    %v801 = vunpack.c.h.b16 %v620
    %v802 = vunpack.c.l.b16 %v621
    %v803 = vunpack.c.h.b16 %v621
    %v804 = vunpack.c.l.b16 %v622
    %v805 = vunpack.c.h.b16 %v622
    %v806 = vunpack.c.l.b16 %v623
    %v807 = vunpack.c.h.b16 %v623
    %v808 = vunpack.c.l.b16 %v624
    %v809 = vunpack.c.h.b16 %v624
    %v810 = vunpack.c.l.b16 %v625
    %v811 = vunpack.c.h.b16 %v625
    %v812 = vunpack.c.l.b16 %v626
    %v813 = vunpack.c.h.b16 %v626
    %v814 = vunpack.c.l.b16 %v627
    %v815 = vunpack.c.h.b16 %v627
    %v816 = vunpack.c.l.b16 %v628
    %v817 = vunpack.c.h.b16 %v628
    %v818 = vunpack.c.l.b16 %v629
    %v819 = vunpack.c.h.b16 %v629
    %v820 = vunpack.c.l.b16 %v630
    %v821 = vunpack.c.h.b16 %v630
    %v822 = vunpack.c.l.b16 %v631
    %v823 = vunpack.c.h.b16 %v631
    %v824 = vunpack.c.l.b16 %v632
    %v825 = vunpack.c.h.b16 %v632
    %v826 = vpack.c.b16 %v702, %v698
    %v827 = vpack.c.b16 %v703, %v699
    %v828 = vpack.c.b16 %v704, %v700
    %v829 = vpack.c.b16 %v705, %v701
    %v830 = vpack.c.b16 %v710, %v706
    %v831 = vpack.c.b16 %v711, %v707
    %v832 = vpack.c.b16 %v712, %v708
    %v833 = vpack.c.b16 %v713, %v709
    %v834 = vpack.c.b16 %v718, %v714
    %v835 = vpack.c.b16 %v719, %v715
    %v836 = vpack.c.b16 %v720, %v716
    %v837 = vpack.c.b16 %v721, %v717
    %v838 = vpack.c.b16 %v726, %v722
    %v839 = vpack.c.b16 %v727, %v723
    %v840 = vpack.c.b16 %v728, %v724
    %v841 = vpack.c.b16 %v729, %v725
    %v842 = vpack.c.b16 %v734, %v730
    %v843 = vpack.c.b16 %v735, %v731
    %v844 = vpack.c.b16 %v736, %v732
    %v845 = vpack.c.b16 %v737, %v733
    %v846 = vpack.c.b16 %v742, %v738
    %v847 = vpack.c.b16 %v743, %v739
    %v848 = vpack.c.b16 %v744, %v740
    %v849 = vpack.c.b16 %v745, %v741
    %v850 = vpack.c.b16 %v750, %v746
    %v851 = vpack.c.b16 %v751, %v747
    %v852 = vpack.c.b16 %v752, %v748
    %v853 = vpack.c.b16 %v753, %v749
    %v854 = vpack.c.b16 %v758, %v754
    %v855 = vpack.c.b16 %v759, %v755
    %v856 = vpack.c.b16 %v760, %v756
    %v857 = vpack.c.b16 %v761, %v757
    %v858 = vpack.c.b16 %v766, %v762
    %v859 = vpack.c.b16 %v767, %v763
    %v860 = vpack.c.b16 %v768, %v764
    %v861 = vpack.c.b16 %v769, %v765
    %v862 = vpack.c.b16 %v774, %v770
    %v863 = vpack.c.b16 %v775, %v771
    %v864 = vpack.c.b16 %v776, %v772
    %v865 = vpack.c.b16 %v777, %v773
    %v866 = vpack.c.b16 %v782, %v778
    %v867 = vpack.c.b16 %v783, %v779
    %v868 = vpack.c.b16 %v784, %v780
    %v869 = vpack.c.b16 %v785, %v781
    %v870 = vpack.c.b16 %v790, %v786
    %v871 = vpack.c.b16 %v791, %v787
    %v872 = vpack.c.b16 %v792, %v788
    %v873 = vpack.c.b16 %v793, %v789
    %v874 = vpack.c.b16 %v798, %v794
    %v875 = vpack.c.b16 %v799, %v795
    %v876 = vpack.c.b16 %v800, %v796
    %v877 = vpack.c.b16 %v801, %v797
    %v878 = vpack.c.b16 %v806, %v802
    %v879 = vpack.c.b16 %v807, %v803
    %v880 = vpack.c.b16 %v808, %v804
    %v881 = vpack.c.b16 %v809, %v805
    %v882 = vpack.c.b16 %v814, %v810
    %v883 = vpack.c.b16 %v815, %v811
    %v884 = vpack.c.b16 %v816, %v812
    %v885 = vpack.c.b16 %v817, %v813
    %v886 = vpack.c.b16 %v822, %v818
    %v887 = vpack.c.b16 %v823, %v819
    %v888 = vpack.c.b16 %v824, %v820
    %v889 = vpack.c.b16 %v825, %v821
    %v955 = vlaneseq
    %v956 = vshrl.u32 %v955, 7
    %v957 = vsub.s32 0, %v956
    %v958 = vrot.slane %v633, %v957
    %v959 = vlaneseq
    %v960 = vshrl.u32 %v959, 7
    %v961 = vsub.s32 1, %v960
    %v962 = vrot.slane %v633, %v961
    %v963 = vlaneseq
    %v964 = vshrl.u32 %v963, 7
    %v965 = vsub.s32 2, %v964
    %v966 = vrot.slane %v633, %v965
    %v967 = vlaneseq
    %v968 = vshrl.u32 %v967, 7
    %v969 = vsub.s32 3, %v968
    %v970 = vrot.slane %v633, %v969
    %975 = vmatprep.subr.bf16.mxu0 %v855
    %976 = vmatpush1.bf16.msra.mxu0 %v854
    %977 = vmatprep.subr.bf16.mxu0 %v851
    %978 = vmatpush1.bf16.msra.mxu0 %v850
    %979 = vmatprep.subr.bf16.mxu0 %v847
    %980 = vmatpush1.bf16.msra.mxu0 %v846
    %981 = vmatprep.subr.bf16.mxu0 %v843
    %982 = vmatpush1.bf16.msra.mxu0 %v842
    %983 = vmatprep.subr.bf16.mxu0 %v839
    %984 = vmatpush1.bf16.msra.mxu0 %v838
    %985 = vmatprep.subr.bf16.mxu0 %v835
    %986 = vmatpush1.bf16.msra.mxu0 %v834
    %987 = vmatprep.subr.bf16.mxu0 %v831
    %988 = vmatpush1.bf16.msra.mxu0 %v830
    %989 = vmatprep.subr.bf16.mxu0 %v827
    %990 = vmatpush1.bf16.msra.mxu0 %v826
    %991 = vmatprep.subr.bf16.mxu0 %v887
    %992 = vmatpush2.bf16.msra.mxu0 %v886
    %993 = vmatprep.subr.bf16.mxu0 %v883
    %994 = vmatpush2.bf16.msra.mxu0 %v882
    %995 = vmatprep.subr.bf16.mxu0 %v879
    %996 = vmatpush2.bf16.msra.mxu0 %v878
    %997 = vmatprep.subr.bf16.mxu0 %v875
    %998 = vmatpush2.bf16.msra.mxu0 %v874
    %999 = vmatprep.subr.bf16.mxu0 %v871
    %1000 = vmatpush2.bf16.msra.mxu0 %v870
    %1001 = vmatprep.subr.bf16.mxu0 %v867
    %1002 = vmatpush2.bf16.msra.mxu0 %v866
    %1003 = vmatprep.subr.bf16.mxu0 %v863
    %1004 = vmatpush2.bf16.msra.mxu0 %v862
    %1005 = vmatprep.subr.bf16.mxu0 %v859
    %1006 = vmatpush2.bf16.msra.mxu0 %v858
    %1007 = vmatprep.mubr.bf16.mxu0 %v125
    %1008 = vmatmul.mubr.bf16.gmra.mxu0 %v568
    %v1009 = vpop.f32.mrf.mxu0
    %v1010 = vadd.f32 %v958, %v1009
    %v1011 = vpop.f32.mrf.mxu0
    %v1012 = vadd.f32 %v962, %v1011
    %v1013 = vpop.f32.mrf.mxu0
    %v1014 = vpop.f32.mrf.mxu0
    %1015 = vdwg.mxu0
    %1016 = vmatprep.subr.bf16.mxu0 %v857
    %1017 = vmatpush1.bf16.msra.mxu0 %v856
    %1018 = vmatprep.subr.bf16.mxu0 %v853
    %1019 = vmatpush1.bf16.msra.mxu0 %v852
    %1020 = vmatprep.subr.bf16.mxu0 %v849
    %1021 = vmatpush1.bf16.msra.mxu0 %v848
    %1022 = vmatprep.subr.bf16.mxu0 %v845
    %1023 = vmatpush1.bf16.msra.mxu0 %v844
    %1024 = vmatprep.subr.bf16.mxu0 %v841
    %1025 = vmatpush1.bf16.msra.mxu0 %v840
    %1026 = vmatprep.subr.bf16.mxu0 %v837
    %1027 = vmatpush1.bf16.msra.mxu0 %v836
    %1028 = vmatprep.subr.bf16.mxu0 %v833
    %1029 = vmatpush1.bf16.msra.mxu0 %v832
    %1030 = vmatprep.subr.bf16.mxu0 %v829
    %1031 = vmatpush1.bf16.msra.mxu0 %v828
    %1032 = vmatprep.subr.bf16.mxu0 %v889
    %1033 = vmatpush2.bf16.msra.mxu0 %v888
    %1034 = vmatprep.subr.bf16.mxu0 %v885
    %1035 = vmatpush2.bf16.msra.mxu0 %v884
    %1036 = vmatprep.subr.bf16.mxu0 %v881
    %1037 = vmatpush2.bf16.msra.mxu0 %v880
    %1038 = vmatprep.subr.bf16.mxu0 %v877
    %1039 = vmatpush2.bf16.msra.mxu0 %v876
    %1040 = vmatprep.subr.bf16.mxu0 %v873
    %1041 = vmatpush2.bf16.msra.mxu0 %v872
    %1042 = vmatprep.subr.bf16.mxu0 %v869
    %1043 = vmatpush2.bf16.msra.mxu0 %v868
    %1044 = vmatprep.subr.bf16.mxu0 %v865
    %1045 = vmatpush2.bf16.msra.mxu0 %v864
    %1046 = vmatprep.subr.bf16.mxu0 %v861
    %1047 = vmatpush2.bf16.msra.mxu0 %v860
    %1048 = vmatprep.mubr.bf16.mxu0 %v125
    %1049 = vmatmul.mubr.bf16.gmra.mxu0 %v568
    %v1050 = vpop.f32.mrf.mxu0
    %v1051 = vadd.f32 %v966, %v1050
    %v1052 = vpop.f32.mrf.mxu0
    %v1053 = vadd.f32 %v970, %v1052
    %v1054 = vpop.f32.mrf.mxu0
    %v1055 = vpop.f32.mrf.mxu0
    %1056 = vdwg.mxu0
    %v1057 = vxor.u32 %v1010, 2147483648
    %v1058 = vmul.f32 %v1057, 1.442695
    %v1059 = vpow.pop %v1058
    %v1060 = vadd.f32 %v1059, 1.0
    %v1061 = vrcp.pop %v1060
    %v1062 = vmul.f32 1.0, %v1061
    %v1063 = vxor.u32 %v1012, 2147483648
    %v1064 = vmul.f32 %v1063, 1.442695
    %v1065 = vpow.pop %v1064
    %v1066 = vadd.f32 %v1065, 1.0
    %v1067 = vrcp.pop %v1066
    %v1068 = vmul.f32 1.0, %v1067
    %v1069 = vmul.f32 %v1062, %v1053
    %v1070 = vadd.f32 %v1051, %v1069
    %v1071 = vtanh.pop %v1070
    %v1072 = vsub.f32 1.0, %v1068
    %v1073 = vmul.f32 %v1072, %v1071
    %v1074 = vmul.f32 %v1068, %v124
    %v1075 = vadd.f32 %v1073, %v1074
    %v1076 = vpack.c.bf16 %v1075, %v1075
    %v1077 = vld [vmem:[#allocation10] sm:$0xf]
    %v1078 = vld [vmem:[#allocation10 + $0x4] sm:$0xf]
    %v1079 = vld [vmem:[#allocation10 + $0x8] sm:$0xf]
    %v1080 = vld [vmem:[#allocation10 + $0xc] sm:$0xf]
    %v1081 = vld [vmem:[#allocation10 + $0x10] sm:$0xf]
    %v1082 = vld [vmem:[#allocation10 + $0x14] sm:$0xf]
    %v1083 = vld [vmem:[#allocation10 + $0x18] sm:$0xf]
    %v1084 = vld [vmem:[#allocation10 + $0x1c] sm:$0xf]
    %v1085 = vld [vmem:[#allocation10 + $0x20] sm:$0xf]
    %v1086 = vld [vmem:[#allocation10 + $0x24] sm:$0xf]
    %v1087 = vld [vmem:[#allocation10 + $0x28] sm:$0xf]
    %v1088 = vld [vmem:[#allocation10 + $0x2c] sm:$0xf]
    %v1089 = vld [vmem:[#allocation10 + $0x30] sm:$0xf]
    %v1090 = vld [vmem:[#allocation10 + $0x34] sm:$0xf]
    %v1091 = vld [vmem:[#allocation10 + $0x38] sm:$0xf]
    %v1092 = vld [vmem:[#allocation10 + $0x3c] sm:$0xf]
    %v1093 = vld [vmem:[#allocation12] sm:$0x1]
    %v1110 = vunpack.c.l.b16 %v1077
    %v1111 = vunpack.c.l.b16 %v1078
    %v1112 = vunpack.c.l.b16 %v1079
    %v1113 = vunpack.c.l.b16 %v1080
    %v1114 = vunpack.c.l.b16 %v1081
    %v1115 = vunpack.c.l.b16 %v1082
    %v1116 = vunpack.c.l.b16 %v1083
    %v1117 = vunpack.c.l.b16 %v1084
    %v1118 = vunpack.c.l.b16 %v1085
    %v1119 = vunpack.c.l.b16 %v1086
    %v1120 = vunpack.c.l.b16 %v1087
    %v1121 = vunpack.c.l.b16 %v1088
    %v1122 = vunpack.c.l.b16 %v1089
    %v1123 = vunpack.c.l.b16 %v1090
    %v1124 = vunpack.c.l.b16 %v1091
    %v1125 = vunpack.c.l.b16 %v1092
    %v1126 = vpack.c.b16 %v1111, %v1110
    %v1127 = vpack.c.b16 %v1113, %v1112
    %v1128 = vpack.c.b16 %v1115, %v1114
    %v1129 = vpack.c.b16 %v1117, %v1116
    %v1130 = vpack.c.b16 %v1119, %v1118
    %v1131 = vpack.c.b16 %v1121, %v1120
    %v1132 = vpack.c.b16 %v1123, %v1122
    %v1133 = vpack.c.b16 %v1125, %v1124
    %1142 = vmatprep.subr.bf16.mxu0 0
    %1143 = vmatpush1.bf16.msra.mxu0 %v1133
    %1144 = vmatprep.subr.bf16.mxu0 0
    %1145 = vmatpush1.bf16.msra.mxu0 %v1132
    %1146 = vmatprep.subr.bf16.mxu0 0
    %1147 = vmatpush1.bf16.msra.mxu0 %v1131
    %1148 = vmatprep.subr.bf16.mxu0 0
    %1149 = vmatpush1.bf16.msra.mxu0 %v1130
    %1150 = vmatprep.subr.bf16.mxu0 0
    %1151 = vmatpush1.bf16.msra.mxu0 %v1129
    %1152 = vmatprep.subr.bf16.mxu0 0
    %1153 = vmatpush1.bf16.msra.mxu0 %v1128
    %1154 = vmatprep.subr.bf16.mxu0 0
    %1155 = vmatpush1.bf16.msra.mxu0 %v1127
    %1156 = vmatprep.subr.bf16.mxu0 0
    %1157 = vmatpush1.bf16.msra.mxu0 %v1126
    %1158 = vmatprep.subr.bf16.mxu0 0
    %1159 = vmatpush2.bf16.msra.mxu0 0
    %1160 = vmatprep.subr.bf16.mxu0 0
    %1161 = vmatpush2.bf16.msra.mxu0 0
    %1162 = vmatprep.subr.bf16.mxu0 0
    %1163 = vmatpush2.bf16.msra.mxu0 0
    %1164 = vmatprep.subr.bf16.mxu0 0
    %1165 = vmatpush2.bf16.msra.mxu0 0
    %1166 = vmatprep.subr.bf16.mxu0 0
    %1167 = vmatpush2.bf16.msra.mxu0 0
    %1168 = vmatprep.subr.bf16.mxu0 0
    %1169 = vmatpush2.bf16.msra.mxu0 0
    %1170 = vmatprep.subr.bf16.mxu0 0
    %1171 = vmatpush2.bf16.msra.mxu0 0
    %1172 = vmatprep.subr.bf16.mxu0 0
    %1173 = vmatpush2.bf16.msra.mxu0 0
    %1174 = vmatprep.mubr.bf16.mxu0 0
    %1175 = vmatmul.mubr.bf16.gmra.mxu0 %v1076
    %v1176 = vpop.f32.mrf.mxu0
    %v1177 = vadd.f32 %v1093, %v1176
    %v1178 = vpop.f32.mrf.mxu0
    %v1179 = vpop.f32.mrf.mxu0
    %v1180 = vpop.f32.mrf.mxu0
    %1181 = vdwg.mxu0
    %vm1182 = vcmp.lt.s32.totalorder %v296, 40
    %v1183 = vsel %vm1182, %v1177, -inf
    %v1184 = vsel %vm299, %v1183, -inf
    %1185 = vmax.xlane.f32.xlu0 %v1184
    %v1186 = vpop.xlane.xlu0 %1185
    %v1187 = vsub.f32 %v1183, %v1186
    %v1188 = vmul.f32 %v1187, 1.442695
    %v1189 = vpow.pop %v1188
    %v1190 = vsel %vm299, %v1189, 0.0
    %1191 = vadd.xlane.f32.xlu0 %v1190
    %v1192 = vpop.xlane.xlu0 %1191
    %v1193 = vlog2.pop %v1192
    %v1194 = vmul.f32 %v1193, 0.6931472
    %v1195 = vsub.f32 %v1187, %v1194
    %1196 = vst [vmem:[#allocation13] sm:$0x1] %v1195
    %1197 = vst [vmem:[%s13] sm:$0x1] %v1075
    %1198 = vst [vmem:[#allocation14] sm:$0x1] %v310
    // Predicated region
    $region66: #{step.1} parent=1 // pred_check
      _
    $region67: #{step.1} parent=1 // pred_check_branch
      %1200 = sbr.rel (0) target = $region69
    $region68: #{step.1} parent=1 // pred_region
      %s1202 = ssub.s32 16, 16
      %1203 = vsyncadd [#allocation6], %s1202
      %s1205 = sshll.u32 [#allocation13], 4
      %s1206 = int_to_ptr.vmem [resolvable:$true] %s1205
      %1208 = dma.vmem_to_hbm [thread:$0]  %s1206, 16, %s12, [#allocation6]
    $region69: #{step.1} parent=1 // pred_fallthru
      _
    // Predicated region
    $region70: #{step.1} parent=1 // pred_check
      _
    $region71: #{step.1} parent=1 // pred_check_branch
      %1210 = sbr.rel (0) target = $region73
    $region72: #{step.1} parent=1 // pred_region
      _
    $region73: #{step.1} parent=1 // pred_fallthru
      _
    // Predicated region
    $region74: #{step.1} parent=1 // pred_check
      _
    $region75: #{step.1} parent=1 // pred_check_branch
      %1212 = sbr.rel (0) target = $region77
    $region76: #{step.1} parent=1 // pred_region
      %s1214 = ssub.s32 16, 16
      %1215 = vsyncadd [#allocation15], %s1214
      %s1217 = sshll.u32 [#allocation14], 4
      %s1218 = int_to_ptr.vmem [resolvable:$true] %s1217
      %1220 = dma.vmem_to_hbm [thread:$0]  %s1218, 16, %s14, [#allocation15]
    $region77: #{step.1} parent=1 // pred_fallthru
      _
    // Predicated region
    $region78: #{step.1} parent=1 // pred_check
      _
    $region79: #{step.1} parent=1 // pred_check_branch
      %1222 = sbr.rel (0) target = $region81
    $region80: #{step.1} parent=1 // pred_region
      %1223 = dma.done [#allocation6], 16
    $region81: #{step.1} parent=1 // pred_fallthru
      _
    // Predicated region
    $region82: #{step.1} parent=1 // pred_check
      _
    $region83: #{step.1} parent=1 // pred_check_branch
      %1225 = sbr.rel (0) target = $region85
    $region84: #{step.1} parent=1 // pred_region
      _
    $region85: #{step.1} parent=1 // pred_fallthru
      _
    // Predicated region
    $region86: #{step.1} parent=1 // pred_check
      _
    $region87: #{step.1} parent=1 // pred_check_branch
      %1227 = sbr.rel (0) target = $region89
    $region88: #{step.1} parent=1 // pred_region
      %1228 = dma.done [#allocation15], 16
    $region89: #{step.1} parent=1 // pred_fallthru
      _
    %1229 = vsyncpa [#allocation5], 1
    %1230 = vsyncpa [#allocation8], 1
    %1231 = vsyncpa [#allocation11], 1
    %1232 = vsyncpa [#allocation6], 1
    %1233 = vsyncpa [#allocation15], 1

</llo_original>
